<compile_context>
chip_gen: v6e
topology: v6e:2x2x1
jax: 0.10.0
libtpu: 0.0.40
codegen_flags: <defaults>
</compile_context>

<pallas_src>
import math

import jax
import jax.numpy as jnp
from jax import lax
from jax.experimental import pallas as pl
from jax.experimental.pallas import tpu as pltpu


# ----------------------------------------------------------------------------
# Fused kernel: per-block input projection + serial recurrence + final FC
# ----------------------------------------------------------------------------
def lstm_fused_kernel(x_ref, w_ih_ref, b_ref, w_hh_ref, w_fc_ref, b_fc_ref,
                      out_ref, xproj_ref, h_ref, c_ref):
    # x_ref:      (t_blk*Bp, D)     bf16   streamed time block (time-major)
    # w_ih_ref:   (D, 4*Hp)         bf16   resident (constant index_map)
    # b_ref:      (1, 4*Hp)         f32    b_ih + b_hh, gate-padded
    # w_hh_ref:   (Hp, 4*Hp)        bf16   resident
    # w_fc_ref:   (Hp, Cp)          bf16   resident
    # b_fc_ref:   (1, Cp)           f32
    # out_ref:    (Bp, Cp)          f32    same block for every grid step
    # xproj_ref:  (t_blk*Bp, 4*Hp)  f32    VMEM scratch (per-block projection)
    # h_ref/c_ref:(Bp, Hp)          f32    VMEM scratch, persists across grid
    tb = pl.program_id(0)
    last = pl.num_programs(0) - 1
    Bp, Hp = h_ref.shape
    t_blk = xproj_ref.shape[0] // Bp

    @pl.when(tb == 0)
    def _init():
        h_ref[...] = jnp.zeros_like(h_ref)
        c_ref[...] = jnp.zeros_like(c_ref)

    # Input projection for the whole time block: ONE big MXU matmul
    # (t_blk*Bp, D) @ (D, 4Hp) + bias  -> f32 accumulation in VMEM scratch.
    xproj_ref[...] = (
        jnp.dot(x_ref[...], w_ih_ref[...], preferred_element_type=jnp.float32)
        + b_ref[...]
    )

    w_hh = w_hh_ref[...]  # keep resident across the whole unrolled block

    def step(j, carry):
        h, c = carry
        row = pl.multiple_of(j * Bp, Bp)
        x_t = xproj_ref[pl.ds(row, Bp), :]                       # (Bp, 4Hp)
        gates = x_t + jnp.dot(h.astype(w_hh.dtype), w_hh,
                              preferred_element_type=jnp.float32)
        # lane-aligned gate slices (Hp is a multiple of 128); PyTorch order
        i_g = jax.nn.sigmoid(gates[:, 0 * Hp:1 * Hp])
        f_g = jax.nn.sigmoid(gates[:, 1 * Hp:2 * Hp])
        g_g = jnp.tanh(gates[:, 2 * Hp:3 * Hp])
        o_g = jax.nn.sigmoid(gates[:, 3 * Hp:4 * Hp])
        c_new = f_g * c + i_g * g_g
        h_new = o_g * jnp.tanh(c_new)
        return h_new, c_new

    # unrolled: gives the scheduler cross-timestep visibility (MXU/VPU/EUP mix)
    h, c = lax.fori_loop(0, t_blk, step, (h_ref[...], c_ref[...]), unroll=True)
    h_ref[...] = h
    c_ref[...] = c

    @pl.when(tb == last)
    def _finalize():
        out_ref[...] = (
            jnp.dot(h.astype(w_fc_ref.dtype), w_fc_ref[...],
                    preferred_element_type=jnp.float32)
            + b_fc_ref[...]
        )


# ----------------------------------------------------------------------------
# Wrapper: layout prep (padding / transposes / dtype casts) + one pallas_call
# ----------------------------------------------------------------------------
def _round_up(x, m):
    return ((x + m - 1) // m) * m


def rnn_feature_forward(x, params, *, matmul_dtype=jnp.bfloat16):
    """x: (B, T, D) batch_first, like the PyTorch module. Returns (B, C)."""
    w_ih, w_hh, b_ih, b_hh, w_fc, b_fc = params
    B, T, D = x.shape
    H = w_hh.shape[1]
    C = w_fc.shape[0]
    f32 = jnp.float32

    Bp = _round_up(B, 8)        # f32 sublane granularity
    Hp = _round_up(H, 128)      # lane-aligned gates; 4*Hp % 256 == 0
    Cp = _round_up(C, 128)      # lane-dense output store

    # time block per grid step (amortizes per-step grid overhead); keep the
    # per-block projection scratch modest so it never crowds VMEM.
    t_blk = 1
    for cand in (32, 16, 8, 4, 2):
        if T % cand == 0 and cand * Bp * 4 * Hp * 4 <= (2 << 20):
            t_blk = cand
            break
    n_tb = T // t_blk

    # ---- zero-padded, per-gate-aligned weight layout (plain-JAX glue) ----
    def pad_gate_rows(w):  # (4H, K) -> (4Hp, K), gate k starts at k*Hp
        out = jnp.zeros((4 * Hp, w.shape[1]), f32)
        for k in range(4):
            out = out.at[k * Hp:k * Hp + H].set(w[k * H:(k + 1) * H].astype(f32))
        return out

    def pad_gate_bias(b):  # (4H,) -> (4Hp,)
        out = jnp.zeros((4 * Hp,), f32)
        for k in range(4):
            out = out.at[k * Hp:k * Hp + H].set(b[k * H:(k + 1) * H].astype(f32))
        return out

    w_ih_p = pad_gate_rows(w_ih)                                   # (4Hp, D)
    w_hh_p = pad_gate_rows(w_hh)                                   # (4Hp, H)
    w_hh_p = jnp.concatenate(
        [w_hh_p, jnp.zeros((4 * Hp, Hp - H), f32)], axis=1)        # (4Hp, Hp)
    b_comb = pad_gate_bias(b_ih + b_hh).reshape(1, 4 * Hp)         # (1, 4Hp)

    w_fc_p = jnp.zeros((Cp, Hp), f32).at[:C, :H].set(w_fc.astype(f32))
    b_fc_p = jnp.zeros((1, Cp), f32).at[0, :C].set(b_fc.astype(f32))

    # time-major x, batch padded, flattened to (T*Bp, D), bf16 for the MXU
    x_tbd = jnp.transpose(x, (1, 0, 2)).astype(f32)                # (T, B, D)
    x_pad = jnp.zeros((T, Bp, D), f32).at[:, :B, :].set(x_tbd)
    x_mm = x_pad.reshape(T * Bp, D).astype(matmul_dtype)           # (T*Bp, D)

    w_ih_t = jnp.transpose(w_ih_p).astype(matmul_dtype)            # (D, 4Hp)
    w_hh_t = jnp.transpose(w_hh_p).astype(matmul_dtype)            # (Hp, 4Hp)
    w_fc_t = jnp.transpose(w_fc_p).astype(matmul_dtype)            # (Hp, Cp)

    # ---- single fused pallas_call: streamed projection + recurrence + FC ---
    # TODO(synk): for large B on v7x, add a leading "parallel" batch-block grid
    # axis (per-core h/c scratch) so both TensorCores are used.
    out_pad = pl.pallas_call(
        lstm_fused_kernel,
        out_shape=jax.ShapeDtypeStruct((Bp, Cp), f32),
        grid_spec=pltpu.PrefetchScalarGridSpec(
            num_scalar_prefetch=0,
            grid=(n_tb,),
            in_specs=[
                pl.BlockSpec((t_blk * Bp, D), lambda t: (t, 0)),   # x block
                pl.BlockSpec((D, 4 * Hp), lambda t: (0, 0)),       # W_ih^T
                pl.BlockSpec((1, 4 * Hp), lambda t: (0, 0)),       # bias
                pl.BlockSpec((Hp, 4 * Hp), lambda t: (0, 0)),      # W_hh^T
                pl.BlockSpec((Hp, Cp), lambda t: (0, 0)),          # W_fc^T
                pl.BlockSpec((1, Cp), lambda t: (0, 0)),           # b_fc
            ],
            out_specs=pl.BlockSpec((Bp, Cp), lambda t: (0, 0)),
            scratch_shapes=[
                pltpu.VMEM((t_blk * Bp, 4 * Hp), f32),  # per-block x_proj
                pltpu.VMEM((Bp, Hp), f32),              # h carry
                pltpu.VMEM((Bp, Hp), f32),              # c carry
            ],
        ),
        compiler_params=pltpu.CompilerParams(
            dimension_semantics=("arbitrary",)),
    )(x_mm, w_ih_t, b_comb, w_hh_t, w_fc_t, b_fc_p)

    return out_pad[:B, :C]


# ----------------------------------------------------------------------------
# Init + pure-JAX reference (matches the PyTorch forward exactly, f32)
# ----------------------------------------------------------------------------
def init_params(key, in_dim, hidden_dim, classes):
    """Deterministic init mirroring PyTorch default U(-1/sqrt(H), 1/sqrt(H))."""
    ks = jax.random.split(key, 6)
    bound = 1.0 / math.sqrt(hidden_dim)
    u = lambda k, shape: jax.random.uniform(
        k, shape, minval=-bound, maxval=bound, dtype=jnp.float32)
    w_ih = u(ks[0], (4 * hidden_dim, in_dim))      # weight_ih_l0
    w_hh = u(ks[1], (4 * hidden_dim, hidden_dim))  # weight_hh_l0
    b_ih = u(ks[2], (4 * hidden_dim,))             # bias_ih_l0
    b_hh = u(ks[3], (4 * hidden_dim,))             # bias_hh_l0
    w_fc = u(ks[4], (classes, hidden_dim))         # fc.weight
    b_fc = u(ks[5], (classes,))                    # fc.bias
    return w_ih, w_hh, b_ih, b_hh, w_fc, b_fc


def rnn_feature_reference(x, params):
    w_ih, w_hh, b_ih, b_hh, w_fc, b_fc = params
    B, T, D = x.shape
    H = w_hh.shape[1]
    h = jnp.zeros((B, H), jnp.float32)
    c = jnp.zeros((B, H), jnp.float32)
    for t in range(T):
        gates = x[:, t, :] @ w_ih.T + b_ih + h @ w_hh.T + b_hh
        i_g = jax.nn.sigmoid(gates[:, 0 * H:1 * H])
        f_g = jax.nn.sigmoid(gates[:, 1 * H:2 * H])
        g_g = jnp.tanh(gates[:, 2 * H:3 * H])
        o_g = jax.nn.sigmoid(gates[:, 3 * H:4 * H])
        c = f_g * c + i_g * g_g
        h = o_g * jnp.tanh(c)
    return h @ w_fc.T + b_fc


if __name__ == "__main__":
    B, T, D, H, C = 2, 8, 16, 32, 4  # batch, seq, in_dim, hidden_dim, classes

    key = jax.random.PRNGKey(0)
    k_x, k_p = jax.random.split(key)
    x = jax.random.normal(k_x, (B, T, D), dtype=jnp.float32)
    params = init_params(k_p, D, H, C)

    fwd = jax.jit(rnn_feature_forward)
    out = fwd(x, params)
    out = jax.block_until_ready(out)

    ref = rnn_feature_reference(x, params)
    assert out.shape == (B, C), out.shape
    # bf16 matmul inputs (f32 accumulation) -> slightly widened tolerance
    assert jnp.allclose(out, ref, atol=5e-2, rtol=5e-2), (out, ref)

    print("KERNEL_OK")
</pallas_src>

<mosaic_0001>
module attributes {stable_mosaic.version = 11 : i64} {
  func.func @lstm_fused_kernel(%arg0: i32, %arg1: memref<64x16xbf16, #tpu.memory_space<vmem>>, %arg2: memref<16x512xbf16, #tpu.memory_space<vmem>>, %arg3: memref<1x512xf32, #tpu.memory_space<vmem>>, %arg4: memref<128x512xbf16, #tpu.memory_space<vmem>>, %arg5: memref<128x128xbf16, #tpu.memory_space<vmem>>, %arg6: memref<1x128xf32, #tpu.memory_space<vmem>>, %arg7: memref<8x128xf32, #tpu.memory_space<vmem>>, %arg8: memref<64x512xf32, #tpu.memory_space<vmem>>, %arg9: memref<8x128xf32, #tpu.memory_space<vmem>>, %arg10: memref<8x128xf32, #tpu.memory_space<vmem>>) attributes {dimension_semantics = [#tpu.dimension_semantics<arbitrary>], iteration_bounds = array<i64: 1>, scalar_prefetch = 0 : i64, scratch_operands = 3 : i64, tpu.core_type = #tpu.core_type<tc>, window_params = [{transform_indices = @transform_0, window_bounds = array<i64: 64, 16>}, {pipeline_mode = #tpu.pipeline_mode<synchronous>, transform_indices = @transform_1, window_bounds = array<i64: 16, 512>}, {pipeline_mode = #tpu.pipeline_mode<synchronous>, transform_indices = @transform_2, window_bounds = array<i64: 1, 512>}, {pipeline_mode = #tpu.pipeline_mode<synchronous>, transform_indices = @transform_3, window_bounds = array<i64: 128, 512>}, {pipeline_mode = #tpu.pipeline_mode<synchronous>, transform_indices = @transform_4, window_bounds = array<i64: 128, 128>}, {pipeline_mode = #tpu.pipeline_mode<synchronous>, transform_indices = @transform_5, window_bounds = array<i64: 1, 128>}, {pipeline_mode = #tpu.pipeline_mode<synchronous>, transform_indices = @transform_6, window_bounds = array<i64: 8, 128>}]} {
    %c0_i32 = arith.constant 0 : i32
    %0 = arith.cmpi eq, %arg0, %c0_i32 : i32
    %1 = arith.extui %0 : i1 to i32
    %c0_i32_0 = arith.constant 0 : i32
    %2 = arith.cmpi ne, %1, %c0_i32_0 : i32
    scf.if %2 {
      %cst_69 = arith.constant 0.000000e+00 : f32
      %274 = vector.broadcast %cst_69 : f32 to vector<8x128xf32>
      %c0_70 = arith.constant 0 : index
      %c0_71 = arith.constant 0 : index
      %275 = vector.load %arg9[%c0_70, %c0_71] : memref<8x128xf32, #tpu.memory_space<vmem>>, vector<8x128xf32>
      tpu.vector_store %arg9[%c0_70, %c0_71], %274 {strides = array<i32>} : memref<8x128xf32, #tpu.memory_space<vmem>>, vector<8x128xf32>,
      %cst_72 = arith.constant 0.000000e+00 : f32
      %276 = vector.broadcast %cst_72 : f32 to vector<8x128xf32>
      %c0_73 = arith.constant 0 : index
      %c0_74 = arith.constant 0 : index
      %277 = vector.load %arg10[%c0_73, %c0_74] : memref<8x128xf32, #tpu.memory_space<vmem>>, vector<8x128xf32>
      tpu.vector_store %arg10[%c0_73, %c0_74], %276 {strides = array<i32>} : memref<8x128xf32, #tpu.memory_space<vmem>>, vector<8x128xf32>,
    } else {
    }
    %c0 = arith.constant 0 : index
    %c0_1 = arith.constant 0 : index
    %3 = vector.load %arg1[%c0, %c0_1] : memref<64x16xbf16, #tpu.memory_space<vmem>>, vector<64x16xbf16>
    %c0_2 = arith.constant 0 : index
    %c0_3 = arith.constant 0 : index
    %4 = vector.load %arg2[%c0_2, %c0_3] : memref<16x512xbf16, #tpu.memory_space<vmem>>, vector<16x512xbf16>
    %cst = arith.constant dense<0.000000e+00> : vector<64x512xf32>
    %5 = tpu.matmul %3, %4, %cst {dimension_numbers = #tpu.dot_dimension_numbers<[1], [0], [0], [1], [0, 0, 1, 1], [], []>} : vector<64x16xbf16>, vector<16x512xbf16>, vector<64x512xf32> -> vector<64x512xf32>
    %c0_4 = arith.constant 0 : index
    %c0_5 = arith.constant 0 : index
    %6 = vector.load %arg3[%c0_4, %c0_5] : memref<1x512xf32, #tpu.memory_space<vmem>>, vector<1x512xf32>
    %7 = vector.broadcast %6 : vector<1x512xf32> to vector<64x512xf32>
    %8 = arith.addf %5, %7 : vector<64x512xf32>
    %c0_6 = arith.constant 0 : index
    %c0_7 = arith.constant 0 : index
    %9 = vector.load %arg8[%c0_6, %c0_7] : memref<64x512xf32, #tpu.memory_space<vmem>>, vector<64x512xf32>
    tpu.vector_store %arg8[%c0_6, %c0_7], %8 {strides = array<i32>} : memref<64x512xf32, #tpu.memory_space<vmem>>, vector<64x512xf32>,
    %c0_8 = arith.constant 0 : index
    %c0_9 = arith.constant 0 : index
    %10 = vector.load %arg4[%c0_8, %c0_9] : memref<128x512xbf16, #tpu.memory_space<vmem>>, vector<128x512xbf16>
    %c0_10 = arith.constant 0 : index
    %c0_11 = arith.constant 0 : index
    %11 = vector.load %arg9[%c0_10, %c0_11] : memref<8x128xf32, #tpu.memory_space<vmem>>, vector<8x128xf32>
    %c0_12 = arith.constant 0 : index
    %c0_13 = arith.constant 0 : index
    %12 = vector.load %arg10[%c0_12, %c0_13] : memref<8x128xf32, #tpu.memory_space<vmem>>, vector<8x128xf32>
    %c0_i32_14 = arith.constant 0 : i32
    %c8_i32 = arith.constant 8 : i32
    %13 = arith.muli %c0_i32_14, %c8_i32 : i32
    %14 = tpu.assume_multiple %13, 8 : i32
    %15 = arith.index_cast %14 : i32 to index
    %c0_15 = arith.constant 0 : index
    %16 = vector.load %arg8[%15, %c0_15] : memref<64x512xf32, #tpu.memory_space<vmem>>, vector<8x512xf32>
    %17 = arith.truncf %11 : vector<8x128xf32> to vector<8x128xbf16>
    %cst_16 = arith.constant dense<0.000000e+00> : vector<8x512xf32>
    %18 = tpu.matmul %17, %10, %cst_16 {dimension_numbers = #tpu.dot_dimension_numbers<[1], [0], [0], [1], [0, 0, 1, 1], [], []>} : vector<8x128xbf16>, vector<128x512xbf16>, vector<8x512xf32> -> vector<8x512xf32>
    %19 = arith.addf %16, %18 : vector<8x512xf32>
    %20 = vector.extract_strided_slice %19 {offsets = [0, 0], sizes = [8, 128], strides = [1, 1]} : vector<8x512xf32> to vector<8x128xf32>
    %21 = arith.negf %20 : vector<8x128xf32>
    %22 = math.exp %21 : vector<8x128xf32>
    %cst_17 = arith.constant 1.000000e+00 : f32
    %23 = vector.broadcast %cst_17 : f32 to vector<8x128xf32>
    %24 = arith.addf %23, %22 : vector<8x128xf32>
    %25 = arith.divf %23, %24 : vector<8x128xf32>
    %26 = vector.extract_strided_slice %19 {offsets = [0, 128], sizes = [8, 128], strides = [1, 1]} : vector<8x512xf32> to vector<8x128xf32>
    %27 = arith.negf %26 : vector<8x128xf32>
    %28 = math.exp %27 : vector<8x128xf32>
    %cst_18 = arith.constant 1.000000e+00 : f32
    %29 = vector.broadcast %cst_18 : f32 to vector<8x128xf32>
    %30 = arith.addf %29, %28 : vector<8x128xf32>
    %31 = arith.divf %29, %30 : vector<8x128xf32>
    %32 = vector.extract_strided_slice %19 {offsets = [0, 256], sizes = [8, 128], strides = [1, 1]} : vector<8x512xf32> to vector<8x128xf32>
    %33 = math.tanh %32 : vector<8x128xf32>
    %34 = vector.extract_strided_slice %19 {offsets = [0, 384], sizes = [8, 128], strides = [1, 1]} : vector<8x512xf32> to vector<8x128xf32>
    %35 = arith.negf %34 : vector<8x128xf32>
    %36 = math.exp %35 : vector<8x128xf32>
    %cst_19 = arith.constant 1.000000e+00 : f32
    %37 = vector.broadcast %cst_19 : f32 to vector<8x128xf32>
    %38 = arith.addf %37, %36 : vector<8x128xf32>
    %39 = arith.divf %37, %38 : vector<8x128xf32>
    %40 = arith.mulf %31, %12 : vector<8x128xf32>
    %41 = arith.mulf %25, %33 : vector<8x128xf32>
    %42 = arith.addf %40, %41 : vector<8x128xf32>
    %43 = math.tanh %42 : vector<8x128xf32>
    %44 = arith.mulf %39, %43 : vector<8x128xf32>
    %c1_i32 = arith.constant 1 : i32
    %c8_i32_20 = arith.constant 8 : i32
    %45 = arith.muli %c1_i32, %c8_i32_20 : i32
    %46 = tpu.assume_multiple %45, 8 : i32
    %47 = arith.index_cast %46 : i32 to index
    %c0_21 = arith.constant 0 : index
    %48 = vector.load %arg8[%47, %c0_21] : memref<64x512xf32, #tpu.memory_space<vmem>>, vector<8x512xf32>
    %49 = arith.truncf %44 : vector<8x128xf32> to vector<8x128xbf16>
    %cst_22 = arith.constant dense<0.000000e+00> : vector<8x512xf32>
    %50 = tpu.matmul %49, %10, %cst_22 {dimension_numbers = #tpu.dot_dimension_numbers<[1], [0], [0], [1], [0, 0, 1, 1], [], []>} : vector<8x128xbf16>, vector<128x512xbf16>, vector<8x512xf32> -> vector<8x512xf32>
    %51 = arith.addf %48, %50 : vector<8x512xf32>
    %52 = vector.extract_strided_slice %51 {offsets = [0, 0], sizes = [8, 128], strides = [1, 1]} : vector<8x512xf32> to vector<8x128xf32>
    %53 = arith.negf %52 : vector<8x128xf32>
    %54 = math.exp %53 : vector<8x128xf32>
    %cst_23 = arith.constant 1.000000e+00 : f32
    %55 = vector.broadcast %cst_23 : f32 to vector<8x128xf32>
    %56 = arith.addf %55, %54 : vector<8x128xf32>
    %57 = arith.divf %55, %56 : vector<8x128xf32>
    %58 = vector.extract_strided_slice %51 {offsets = [0, 128], sizes = [8, 128], strides = [1, 1]} : vector<8x512xf32> to vector<8x128xf32>
    %59 = arith.negf %58 : vector<8x128xf32>
    %60 = math.exp %59 : vector<8x128xf32>
    %cst_24 = arith.constant 1.000000e+00 : f32
    %61 = vector.broadcast %cst_24 : f32 to vector<8x128xf32>
    %62 = arith.addf %61, %60 : vector<8x128xf32>
    %63 = arith.divf %61, %62 : vector<8x128xf32>
    %64 = vector.extract_strided_slice %51 {offsets = [0, 256], sizes = [8, 128], strides = [1, 1]} : vector<8x512xf32> to vector<8x128xf32>
    %65 = math.tanh %64 : vector<8x128xf32>
    %66 = vector.extract_strided_slice %51 {offsets = [0, 384], sizes = [8, 128], strides = [1, 1]} : vector<8x512xf32> to vector<8x128xf32>
    %67 = arith.negf %66 : vector<8x128xf32>
    %68 = math.exp %67 : vector<8x128xf32>
    %cst_25 = arith.constant 1.000000e+00 : f32
    %69 = vector.broadcast %cst_25 : f32 to vector<8x128xf32>
    %70 = arith.addf %69, %68 : vector<8x128xf32>
    %71 = arith.divf %69, %70 : vector<8x128xf32>
    %72 = arith.mulf %63, %42 : vector<8x128xf32>
    %73 = arith.mulf %57, %65 : vector<8x128xf32>
    %74 = arith.addf %72, %73 : vector<8x128xf32>
    %75 = math.tanh %74 : vector<8x128xf32>
    %76 = arith.mulf %71, %75 : vector<8x128xf32>
    %c2_i32 = arith.constant 2 : i32
    %c8_i32_26 = arith.constant 8 : i32
    %77 = arith.muli %c2_i32, %c8_i32_26 : i32
    %78 = tpu.assume_multiple %77, 8 : i32
    %79 = arith.index_cast %78 : i32 to index
    %c0_27 = arith.constant 0 : index
    %80 = vector.load %arg8[%79, %c0_27] : memref<64x512xf32, #tpu.memory_space<vmem>>, vector<8x512xf32>
    %81 = arith.truncf %76 : vector<8x128xf32> to vector<8x128xbf16>
    %cst_28 = arith.constant dense<0.000000e+00> : vector<8x512xf32>
    %82 = tpu.matmul %81, %10, %cst_28 {dimension_numbers = #tpu.dot_dimension_numbers<[1], [0], [0], [1], [0, 0, 1, 1], [], []>} : vector<8x128xbf16>, vector<128x512xbf16>, vector<8x512xf32> -> vector<8x512xf32>
    %83 = arith.addf %80, %82 : vector<8x512xf32>
    %84 = vector.extract_strided_slice %83 {offsets = [0, 0], sizes = [8, 128], strides = [1, 1]} : vector<8x512xf32> to vector<8x128xf32>
    %85 = arith.negf %84 : vector<8x128xf32>
    %86 = math.exp %85 : vector<8x128xf32>
    %cst_29 = arith.constant 1.000000e+00 : f32
    %87 = vector.broadcast %cst_29 : f32 to vector<8x128xf32>
    %88 = arith.addf %87, %86 : vector<8x128xf32>
    %89 = arith.divf %87, %88 : vector<8x128xf32>
    %90 = vector.extract_strided_slice %83 {offsets = [0, 128], sizes = [8, 128], strides = [1, 1]} : vector<8x512xf32> to vector<8x128xf32>
    %91 = arith.negf %90 : vector<8x128xf32>
    %92 = math.exp %91 : vector<8x128xf32>
    %cst_30 = arith.constant 1.000000e+00 : f32
    %93 = vector.broadcast %cst_30 : f32 to vector<8x128xf32>
    %94 = arith.addf %93, %92 : vector<8x128xf32>
    %95 = arith.divf %93, %94 : vector<8x128xf32>
    %96 = vector.extract_strided_slice %83 {offsets = [0, 256], sizes = [8, 128], strides = [1, 1]} : vector<8x512xf32> to vector<8x128xf32>
    %97 = math.tanh %96 : vector<8x128xf32>
    %98 = vector.extract_strided_slice %83 {offsets = [0, 384], sizes = [8, 128], strides = [1, 1]} : vector<8x512xf32> to vector<8x128xf32>
    %99 = arith.negf %98 : vector<8x128xf32>
    %100 = math.exp %99 : vector<8x128xf32>
    %cst_31 = arith.constant 1.000000e+00 : f32
    %101 = vector.broadcast %cst_31 : f32 to vector<8x128xf32>
    %102 = arith.addf %101, %100 : vector<8x128xf32>
    %103 = arith.divf %101, %102 : vector<8x128xf32>
    %104 = arith.mulf %95, %74 : vector<8x128xf32>
    %105 = arith.mulf %89, %97 : vector<8x128xf32>
    %106 = arith.addf %104, %105 : vector<8x128xf32>
    %107 = math.tanh %106 : vector<8x128xf32>
    %108 = arith.mulf %103, %107 : vector<8x128xf32>
    %c3_i32 = arith.constant 3 : i32
    %c8_i32_32 = arith.constant 8 : i32
    %109 = arith.muli %c3_i32, %c8_i32_32 : i32
    %110 = tpu.assume_multiple %109, 8 : i32
    %111 = arith.index_cast %110 : i32 to index
    %c0_33 = arith.constant 0 : index
    %112 = vector.load %arg8[%111, %c0_33] : memref<64x512xf32, #tpu.memory_space<vmem>>, vector<8x512xf32>
    %113 = arith.truncf %108 : vector<8x128xf32> to vector<8x128xbf16>
    %cst_34 = arith.constant dense<0.000000e+00> : vector<8x512xf32>
    %114 = tpu.matmul %113, %10, %cst_34 {dimension_numbers = #tpu.dot_dimension_numbers<[1], [0], [0], [1], [0, 0, 1, 1], [], []>} : vector<8x128xbf16>, vector<128x512xbf16>, vector<8x512xf32> -> vector<8x512xf32>
    %115 = arith.addf %112, %114 : vector<8x512xf32>
    %116 = vector.extract_strided_slice %115 {offsets = [0, 0], sizes = [8, 128], strides = [1, 1]} : vector<8x512xf32> to vector<8x128xf32>
    %117 = arith.negf %116 : vector<8x128xf32>
    %118 = math.exp %117 : vector<8x128xf32>
    %cst_35 = arith.constant 1.000000e+00 : f32
    %119 = vector.broadcast %cst_35 : f32 to vector<8x128xf32>
    %120 = arith.addf %119, %118 : vector<8x128xf32>
    %121 = arith.divf %119, %120 : vector<8x128xf32>
    %122 = vector.extract_strided_slice %115 {offsets = [0, 128], sizes = [8, 128], strides = [1, 1]} : vector<8x512xf32> to vector<8x128xf32>
    %123 = arith.negf %122 : vector<8x128xf32>
    %124 = math.exp %123 : vector<8x128xf32>
    %cst_36 = arith.constant 1.000000e+00 : f32
    %125 = vector.broadcast %cst_36 : f32 to vector<8x128xf32>
    %126 = arith.addf %125, %124 : vector<8x128xf32>
    %127 = arith.divf %125, %126 : vector<8x128xf32>
    %128 = vector.extract_strided_slice %115 {offsets = [0, 256], sizes = [8, 128], strides = [1, 1]} : vector<8x512xf32> to vector<8x128xf32>
    %129 = math.tanh %128 : vector<8x128xf32>
    %130 = vector.extract_strided_slice %115 {offsets = [0, 384], sizes = [8, 128], strides = [1, 1]} : vector<8x512xf32> to vector<8x128xf32>
    %131 = arith.negf %130 : vector<8x128xf32>
    %132 = math.exp %131 : vector<8x128xf32>
    %cst_37 = arith.constant 1.000000e+00 : f32
    %133 = vector.broadcast %cst_37 : f32 to vector<8x128xf32>
    %134 = arith.addf %133, %132 : vector<8x128xf32>
    %135 = arith.divf %133, %134 : vector<8x128xf32>
    %136 = arith.mulf %127, %106 : vector<8x128xf32>
    %137 = arith.mulf %121, %129 : vector<8x128xf32>
    %138 = arith.addf %136, %137 : vector<8x128xf32>
    %139 = math.tanh %138 : vector<8x128xf32>
    %140 = arith.mulf %135, %139 : vector<8x128xf32>
    %c4_i32 = arith.constant 4 : i32
    %c8_i32_38 = arith.constant 8 : i32
    %141 = arith.muli %c4_i32, %c8_i32_38 : i32
    %142 = tpu.assume_multiple %141, 8 : i32
    %143 = arith.index_cast %142 : i32 to index
    %c0_39 = arith.constant 0 : index
    %144 = vector.load %arg8[%143, %c0_39] : memref<64x512xf32, #tpu.memory_space<vmem>>, vector<8x512xf32>
    %145 = arith.truncf %140 : vector<8x128xf32> to vector<8x128xbf16>
    %cst_40 = arith.constant dense<0.000000e+00> : vector<8x512xf32>
    %146 = tpu.matmul %145, %10, %cst_40 {dimension_numbers = #tpu.dot_dimension_numbers<[1], [0], [0], [1], [0, 0, 1, 1], [], []>} : vector<8x128xbf16>, vector<128x512xbf16>, vector<8x512xf32> -> vector<8x512xf32>
    %147 = arith.addf %144, %146 : vector<8x512xf32>
    %148 = vector.extract_strided_slice %147 {offsets = [0, 0], sizes = [8, 128], strides = [1, 1]} : vector<8x512xf32> to vector<8x128xf32>
    %149 = arith.negf %148 : vector<8x128xf32>
    %150 = math.exp %149 : vector<8x128xf32>
    %cst_41 = arith.constant 1.000000e+00 : f32
    %151 = vector.broadcast %cst_41 : f32 to vector<8x128xf32>
    %152 = arith.addf %151, %150 : vector<8x128xf32>
    %153 = arith.divf %151, %152 : vector<8x128xf32>
    %154 = vector.extract_strided_slice %147 {offsets = [0, 128], sizes = [8, 128], strides = [1, 1]} : vector<8x512xf32> to vector<8x128xf32>
    %155 = arith.negf %154 : vector<8x128xf32>
    %156 = math.exp %155 : vector<8x128xf32>
    %cst_42 = arith.constant 1.000000e+00 : f32
    %157 = vector.broadcast %cst_42 : f32 to vector<8x128xf32>
    %158 = arith.addf %157, %156 : vector<8x128xf32>
    %159 = arith.divf %157, %158 : vector<8x128xf32>
    %160 = vector.extract_strided_slice %147 {offsets = [0, 256], sizes = [8, 128], strides = [1, 1]} : vector<8x512xf32> to vector<8x128xf32>
    %161 = math.tanh %160 : vector<8x128xf32>
    %162 = vector.extract_strided_slice %147 {offsets = [0, 384], sizes = [8, 128], strides = [1, 1]} : vector<8x512xf32> to vector<8x128xf32>
    %163 = arith.negf %162 : vector<8x128xf32>
    %164 = math.exp %163 : vector<8x128xf32>
    %cst_43 = arith.constant 1.000000e+00 : f32
    %165 = vector.broadcast %cst_43 : f32 to vector<8x128xf32>
    %166 = arith.addf %165, %164 : vector<8x128xf32>
    %167 = arith.divf %165, %166 : vector<8x128xf32>
    %168 = arith.mulf %159, %138 : vector<8x128xf32>
    %169 = arith.mulf %153, %161 : vector<8x128xf32>
    %170 = arith.addf %168, %169 : vector<8x128xf32>
    %171 = math.tanh %170 : vector<8x128xf32>
    %172 = arith.mulf %167, %171 : vector<8x128xf32>
    %c5_i32 = arith.constant 5 : i32
    %c8_i32_44 = arith.constant 8 : i32
    %173 = arith.muli %c5_i32, %c8_i32_44 : i32
    %174 = tpu.assume_multiple %173, 8 : i32
    %175 = arith.index_cast %174 : i32 to index
    %c0_45 = arith.constant 0 : index
    %176 = vector.load %arg8[%175, %c0_45] : memref<64x512xf32, #tpu.memory_space<vmem>>, vector<8x512xf32>
    %177 = arith.truncf %172 : vector<8x128xf32> to vector<8x128xbf16>
    %cst_46 = arith.constant dense<0.000000e+00> : vector<8x512xf32>
    %178 = tpu.matmul %177, %10, %cst_46 {dimension_numbers = #tpu.dot_dimension_numbers<[1], [0], [0], [1], [0, 0, 1, 1], [], []>} : vector<8x128xbf16>, vector<128x512xbf16>, vector<8x512xf32> -> vector<8x512xf32>
    %179 = arith.addf %176, %178 : vector<8x512xf32>
    %180 = vector.extract_strided_slice %179 {offsets = [0, 0], sizes = [8, 128], strides = [1, 1]} : vector<8x512xf32> to vector<8x128xf32>
    %181 = arith.negf %180 : vector<8x128xf32>
    %182 = math.exp %181 : vector<8x128xf32>
    %cst_47 = arith.constant 1.000000e+00 : f32
    %183 = vector.broadcast %cst_47 : f32 to vector<8x128xf32>
    %184 = arith.addf %183, %182 : vector<8x128xf32>
    %185 = arith.divf %183, %184 : vector<8x128xf32>
    %186 = vector.extract_strided_slice %179 {offsets = [0, 128], sizes = [8, 128], strides = [1, 1]} : vector<8x512xf32> to vector<8x128xf32>
    %187 = arith.negf %186 : vector<8x128xf32>
    %188 = math.exp %187 : vector<8x128xf32>
    %cst_48 = arith.constant 1.000000e+00 : f32
    %189 = vector.broadcast %cst_48 : f32 to vector<8x128xf32>
    %190 = arith.addf %189, %188 : vector<8x128xf32>
    %191 = arith.divf %189, %190 : vector<8x128xf32>
    %192 = vector.extract_strided_slice %179 {offsets = [0, 256], sizes = [8, 128], strides = [1, 1]} : vector<8x512xf32> to vector<8x128xf32>
    %193 = math.tanh %192 : vector<8x128xf32>
    %194 = vector.extract_strided_slice %179 {offsets = [0, 384], sizes = [8, 128], strides = [1, 1]} : vector<8x512xf32> to vector<8x128xf32>
    %195 = arith.negf %194 : vector<8x128xf32>
    %196 = math.exp %195 : vector<8x128xf32>
    %cst_49 = arith.constant 1.000000e+00 : f32
    %197 = vector.broadcast %cst_49 : f32 to vector<8x128xf32>
    %198 = arith.addf %197, %196 : vector<8x128xf32>
    %199 = arith.divf %197, %198 : vector<8x128xf32>
    %200 = arith.mulf %191, %170 : vector<8x128xf32>
    %201 = arith.mulf %185, %193 : vector<8x128xf32>
    %202 = arith.addf %200, %201 : vector<8x128xf32>
    %203 = math.tanh %202 : vector<8x128xf32>
    %204 = arith.mulf %199, %203 : vector<8x128xf32>
    %c6_i32 = arith.constant 6 : i32
    %c8_i32_50 = arith.constant 8 : i32
    %205 = arith.muli %c6_i32, %c8_i32_50 : i32
    %206 = tpu.assume_multiple %205, 8 : i32
    %207 = arith.index_cast %206 : i32 to index
    %c0_51 = arith.constant 0 : index
    %208 = vector.load %arg8[%207, %c0_51] : memref<64x512xf32, #tpu.memory_space<vmem>>, vector<8x512xf32>
    %209 = arith.truncf %204 : vector<8x128xf32> to vector<8x128xbf16>
    %cst_52 = arith.constant dense<0.000000e+00> : vector<8x512xf32>
    %210 = tpu.matmul %209, %10, %cst_52 {dimension_numbers = #tpu.dot_dimension_numbers<[1], [0], [0], [1], [0, 0, 1, 1], [], []>} : vector<8x128xbf16>, vector<128x512xbf16>, vector<8x512xf32> -> vector<8x512xf32>
    %211 = arith.addf %208, %210 : vector<8x512xf32>
    %212 = vector.extract_strided_slice %211 {offsets = [0, 0], sizes = [8, 128], strides = [1, 1]} : vector<8x512xf32> to vector<8x128xf32>
    %213 = arith.negf %212 : vector<8x128xf32>
    %214 = math.exp %213 : vector<8x128xf32>
    %cst_53 = arith.constant 1.000000e+00 : f32
    %215 = vector.broadcast %cst_53 : f32 to vector<8x128xf32>
    %216 = arith.addf %215, %214 : vector<8x128xf32>
    %217 = arith.divf %215, %216 : vector<8x128xf32>
    %218 = vector.extract_strided_slice %211 {offsets = [0, 128], sizes = [8, 128], strides = [1, 1]} : vector<8x512xf32> to vector<8x128xf32>
    %219 = arith.negf %218 : vector<8x128xf32>
    %220 = math.exp %219 : vector<8x128xf32>
    %cst_54 = arith.constant 1.000000e+00 : f32
    %221 = vector.broadcast %cst_54 : f32 to vector<8x128xf32>
    %222 = arith.addf %221, %220 : vector<8x128xf32>
    %223 = arith.divf %221, %222 : vector<8x128xf32>
    %224 = vector.extract_strided_slice %211 {offsets = [0, 256], sizes = [8, 128], strides = [1, 1]} : vector<8x512xf32> to vector<8x128xf32>
    %225 = math.tanh %224 : vector<8x128xf32>
    %226 = vector.extract_strided_slice %211 {offsets = [0, 384], sizes = [8, 128], strides = [1, 1]} : vector<8x512xf32> to vector<8x128xf32>
    %227 = arith.negf %226 : vector<8x128xf32>
    %228 = math.exp %227 : vector<8x128xf32>
    %cst_55 = arith.constant 1.000000e+00 : f32
    %229 = vector.broadcast %cst_55 : f32 to vector<8x128xf32>
    %230 = arith.addf %229, %228 : vector<8x128xf32>
    %231 = arith.divf %229, %230 : vector<8x128xf32>
    %232 = arith.mulf %223, %202 : vector<8x128xf32>
    %233 = arith.mulf %217, %225 : vector<8x128xf32>
    %234 = arith.addf %232, %233 : vector<8x128xf32>
    %235 = math.tanh %234 : vector<8x128xf32>
    %236 = arith.mulf %231, %235 : vector<8x128xf32>
    %c7_i32 = arith.constant 7 : i32
    %c8_i32_56 = arith.constant 8 : i32
    %237 = arith.muli %c7_i32, %c8_i32_56 : i32
    %238 = tpu.assume_multiple %237, 8 : i32
    %239 = arith.index_cast %238 : i32 to index
    %c0_57 = arith.constant 0 : index
    %240 = vector.load %arg8[%239, %c0_57] : memref<64x512xf32, #tpu.memory_space<vmem>>, vector<8x512xf32>
    %241 = arith.truncf %236 : vector<8x128xf32> to vector<8x128xbf16>
    %cst_58 = arith.constant dense<0.000000e+00> : vector<8x512xf32>
    %242 = tpu.matmul %241, %10, %cst_58 {dimension_numbers = #tpu.dot_dimension_numbers<[1], [0], [0], [1], [0, 0, 1, 1], [], []>} : vector<8x128xbf16>, vector<128x512xbf16>, vector<8x512xf32> -> vector<8x512xf32>
    %243 = arith.addf %240, %242 : vector<8x512xf32>
    %244 = vector.extract_strided_slice %243 {offsets = [0, 0], sizes = [8, 128], strides = [1, 1]} : vector<8x512xf32> to vector<8x128xf32>
    %245 = arith.negf %244 : vector<8x128xf32>
    %246 = math.exp %245 : vector<8x128xf32>
    %cst_59 = arith.constant 1.000000e+00 : f32
    %247 = vector.broadcast %cst_59 : f32 to vector<8x128xf32>
    %248 = arith.addf %247, %246 : vector<8x128xf32>
    %249 = arith.divf %247, %248 : vector<8x128xf32>
    %250 = vector.extract_strided_slice %243 {offsets = [0, 128], sizes = [8, 128], strides = [1, 1]} : vector<8x512xf32> to vector<8x128xf32>
    %251 = arith.negf %250 : vector<8x128xf32>
    %252 = math.exp %251 : vector<8x128xf32>
    %cst_60 = arith.constant 1.000000e+00 : f32
    %253 = vector.broadcast %cst_60 : f32 to vector<8x128xf32>
    %254 = arith.addf %253, %252 : vector<8x128xf32>
    %255 = arith.divf %253, %254 : vector<8x128xf32>
    %256 = vector.extract_strided_slice %243 {offsets = [0, 256], sizes = [8, 128], strides = [1, 1]} : vector<8x512xf32> to vector<8x128xf32>
    %257 = math.tanh %256 : vector<8x128xf32>
    %258 = vector.extract_strided_slice %243 {offsets = [0, 384], sizes = [8, 128], strides = [1, 1]} : vector<8x512xf32> to vector<8x128xf32>
    %259 = arith.negf %258 : vector<8x128xf32>
    %260 = math.exp %259 : vector<8x128xf32>
    %cst_61 = arith.constant 1.000000e+00 : f32
    %261 = vector.broadcast %cst_61 : f32 to vector<8x128xf32>
    %262 = arith.addf %261, %260 : vector<8x128xf32>
    %263 = arith.divf %261, %262 : vector<8x128xf32>
    %264 = arith.mulf %255, %234 : vector<8x128xf32>
    %265 = arith.mulf %249, %257 : vector<8x128xf32>
    %266 = arith.addf %264, %265 : vector<8x128xf32>
    %267 = math.tanh %266 : vector<8x128xf32>
    %268 = arith.mulf %263, %267 : vector<8x128xf32>
    %c8_i32_62 = arith.constant 8 : i32
    %c0_63 = arith.constant 0 : index
    %c0_64 = arith.constant 0 : index
    %269 = vector.load %arg9[%c0_63, %c0_64] : memref<8x128xf32, #tpu.memory_space<vmem>>, vector<8x128xf32>
    tpu.vector_store %arg9[%c0_63, %c0_64], %268 {strides = array<i32>} : memref<8x128xf32, #tpu.memory_space<vmem>>, vector<8x128xf32>,
    %c0_65 = arith.constant 0 : index
    %c0_66 = arith.constant 0 : index
    %270 = vector.load %arg10[%c0_65, %c0_66] : memref<8x128xf32, #tpu.memory_space<vmem>>, vector<8x128xf32>
    tpu.vector_store %arg10[%c0_65, %c0_66], %266 {strides = array<i32>} : memref<8x128xf32, #tpu.memory_space<vmem>>, vector<8x128xf32>,
    %c0_i32_67 = arith.constant 0 : i32
    %271 = arith.cmpi eq, %arg0, %c0_i32_67 : i32
    %272 = arith.extui %271 : i1 to i32
    %c0_i32_68 = arith.constant 0 : i32
    %273 = arith.cmpi ne, %272, %c0_i32_68 : i32
    scf.if %273 {
      %274 = arith.truncf %268 : vector<8x128xf32> to vector<8x128xbf16>
      %c0_69 = arith.constant 0 : index
      %c0_70 = arith.constant 0 : index
      %275 = vector.load %arg5[%c0_69, %c0_70] : memref<128x128xbf16, #tpu.memory_space<vmem>>, vector<128x128xbf16>
      %cst_71 = arith.constant dense<0.000000e+00> : vector<8x128xf32>
      %276 = tpu.matmul %274, %275, %cst_71 {dimension_numbers = #tpu.dot_dimension_numbers<[1], [0], [0], [1], [0, 0, 1, 1], [], []>} : vector<8x128xbf16>, vector<128x128xbf16>, vector<8x128xf32> -> vector<8x128xf32>
      %c0_72 = arith.constant 0 : index
      %c0_73 = arith.constant 0 : index
      %277 = vector.load %arg6[%c0_72, %c0_73] : memref<1x128xf32, #tpu.memory_space<vmem>>, vector<1x128xf32>
      %278 = vector.broadcast %277 : vector<1x128xf32> to vector<8x128xf32>
      %279 = arith.addf %276, %278 : vector<8x128xf32>
      %c0_74 = arith.constant 0 : index
      %c0_75 = arith.constant 0 : index
      %280 = vector.load %arg7[%c0_74, %c0_75] : memref<8x128xf32, #tpu.memory_space<vmem>>, vector<8x128xf32>
      tpu.vector_store %arg7[%c0_74, %c0_75], %279 {strides = array<i32>} : memref<8x128xf32, #tpu.memory_space<vmem>>, vector<8x128xf32>,
    } else {
    }
    return
  }
  func.func @transform_0(%arg0: i32) -> (i32, i32) {
    %c0_i32 = arith.constant 0 : i32
    %c0_i32_0 = arith.constant 0 : i32
    return %arg0, %c0_i32 : i32, i32
  }
  func.func @transform_1(%arg0: i32) -> (i32, i32) {
    %c0_i32 = arith.constant 0 : i32
    %c0_i32_0 = arith.constant 0 : i32
    %c0_i32_1 = arith.constant 0 : i32
    return %c0_i32, %c0_i32_0 : i32, i32
  }
  func.func @transform_2(%arg0: i32) -> (i32, i32) {
    %c0_i32 = arith.constant 0 : i32
    %c0_i32_0 = arith.constant 0 : i32
    %c0_i32_1 = arith.constant 0 : i32
    return %c0_i32, %c0_i32_0 : i32, i32
  }
  func.func @transform_3(%arg0: i32) -> (i32, i32) {
    %c0_i32 = arith.constant 0 : i32
    %c0_i32_0 = arith.constant 0 : i32
    %c0_i32_1 = arith.constant 0 : i32
    return %c0_i32, %c0_i32_0 : i32, i32
  }
  func.func @transform_4(%arg0: i32) -> (i32, i32) {
    %c0_i32 = arith.constant 0 : i32
    %c0_i32_0 = arith.constant 0 : i32
    %c0_i32_1 = arith.constant 0 : i32
    return %c0_i32, %c0_i32_0 : i32, i32
  }
  func.func @transform_5(%arg0: i32) -> (i32, i32) {
    %c0_i32 = arith.constant 0 : i32
    %c0_i32_0 = arith.constant 0 : i32
    %c0_i32_1 = arith.constant 0 : i32
    return %c0_i32, %c0_i32_0 : i32, i32
  }
  func.func @transform_6(%arg0: i32) -> (i32, i32) {
    %c0_i32 = arith.constant 0 : i32
    %c0_i32_0 = arith.constant 0 : i32
    %c0_i32_1 = arith.constant 0 : i32
    return %c0_i32, %c0_i32_0 : i32, i32
  }
}

</mosaic_0001>

<llo_original>
// kernel: rnn_feature_forward.1
$region0: #{rnn_feature_forward.1}
  #allocation0 [shape = 'u32[]', space=smem, size = 0x4, offset = 0x4, fixed_abs, tag = 'smem constant byte address 0x4 - core index']
  #allocation1 [shape = 'u32[144,128]{1,0:T(1,128)}', space=vmem, size = 0x12000, scoped, tag = 'internal scratch']
  #allocation2 [shape = 'f32[64,512]{1,0:T(8,128)}', space=vmem, size = 0x20000, scoped, tag = 'scratch operand']
  #allocation3 [shape = 'f32[8,128]{1,0:T(8,128)}', space=vmem, size = 0x1000, scoped, tag = 'scratch operand']
  #allocation4 [shape = 'f32[8,128]{1,0:T(8,128)}', space=vmem, size = 0x1000, scoped, tag = 'scratch operand']
  %s0 = inlined_call_operand.vmem [shape: bf16[64,16], index: 0, kind: input, shape index: {}]
  %s1 = inlined_call_operand.vmem [shape: bf16[16,512], index: 1, kind: input, shape index: {}]
  %s2 = inlined_call_operand.vmem [shape: f32[1,512], index: 2, kind: input, shape index: {}]
  %s3 = inlined_call_operand.vmem [shape: bf16[128,512], index: 3, kind: input, shape index: {}]
  %s4 = inlined_call_operand.vmem [shape: bf16[128,128], index: 4, kind: input, shape index: {}]
  %s5 = inlined_call_operand.vmem [shape: f32[1,128], index: 5, kind: input, shape index: {}]
  %s6 = inlined_call_operand.vmem [shape: f32[8,128], index: 6, kind: output, shape index: {}]
  %s7 = sld [smem:[#allocation0]]
  $region42: #{rnn_feature_forward.1} parent=0
    _
  %s9 = ssub.s32 1, %s7
  %s10 = scalar_select 0, %s9, %s7
  // Predicated region
  $region2: #{rnn_feature_forward.1} parent=0 // pred_check
    _
  $region3: #{rnn_feature_forward.1} parent=0 // pred_check_branch
    %12 = sbr.rel (0) target = $region5
  $region4: #{rnn_feature_forward.1} parent=0 // pred_region
    _
  $region5: #{rnn_feature_forward.1} parent=0 // pred_fallthru
    _
  // Predicated region
  $region6: #{rnn_feature_forward.1} parent=0 // pred_check
    _
  $region7: #{rnn_feature_forward.1} parent=0 // pred_check_branch
    %14 = sbr.rel (0) target = $region9
  $region8: #{rnn_feature_forward.1} parent=0 // pred_region
    _
  $region9: #{rnn_feature_forward.1} parent=0 // pred_fallthru
    _
  // Predicated region
  $region10: #{rnn_feature_forward.1} parent=0 // pred_check
    _
  $region11: #{rnn_feature_forward.1} parent=0 // pred_check_branch
    %16 = sbr.rel (0) target = $region13
  $region12: #{rnn_feature_forward.1} parent=0 // pred_region
    _
  $region13: #{rnn_feature_forward.1} parent=0 // pred_fallthru
    _
  // Predicated region
  $region14: #{rnn_feature_forward.1} parent=0 // pred_check
    _
  $region15: #{rnn_feature_forward.1} parent=0 // pred_check_branch
    %18 = sbr.rel (0) target = $region17
  $region16: #{rnn_feature_forward.1} parent=0 // pred_region
    _
  $region17: #{rnn_feature_forward.1} parent=0 // pred_fallthru
    _
  // Predicated region
  $region18: #{rnn_feature_forward.1} parent=0 // pred_check
    _
  $region19: #{rnn_feature_forward.1} parent=0 // pred_check_branch
    %20 = sbr.rel (0) target = $region21
  $region20: #{rnn_feature_forward.1} parent=0 // pred_region
    _
  $region21: #{rnn_feature_forward.1} parent=0 // pred_fallthru
    _
  // Predicated region
  $region22: #{rnn_feature_forward.1} parent=0 // pred_check
    _
  $region23: #{rnn_feature_forward.1} parent=0 // pred_check_branch
    %22 = sbr.rel (0) target = $region25
  $region24: #{rnn_feature_forward.1} parent=0 // pred_region
    _
  $region25: #{rnn_feature_forward.1} parent=0 // pred_fallthru
    _
  %p24 = scmp.eq.s32.totalorder 0, 0
  // Predicated region
  $region26: #{rnn_feature_forward.1} parent=0 // pred_check
    %p25 = pneg %p24
  $region27: #{rnn_feature_forward.1} parent=0 // pred_check_branch
    %27 = sbr.rel (%p25) target = $region29
  $region28: #{rnn_feature_forward.1} parent=0 // pred_region
    %28 = vst [vmem:[#allocation3] sm:$0xff] 0.0
    %29 = vst [vmem:[#allocation4] sm:$0xff] 0.0
  $region29: #{rnn_feature_forward.1} parent=0 // pred_fallthru
    _
  %v30 = vld [vmem:[%s0] sm:$0xf]
  %v31 = vld [vmem:[%s0 + $0x4] sm:$0xf]
  %v32 = vld [vmem:[%s0 + $0x8] sm:$0xf]
  %v33 = vld [vmem:[%s0 + $0xc] sm:$0xf]
  %v34 = vld [vmem:[%s0 + $0x10] sm:$0xf]
  %v35 = vld [vmem:[%s0 + $0x14] sm:$0xf]
  %v36 = vld [vmem:[%s0 + $0x18] sm:$0xf]
  %v37 = vld [vmem:[%s0 + $0x1c] sm:$0xf]
  %v38 = vld [vmem:[%s1] sm:$0xff]
  %v39 = vld [vmem:[%s1 + $0x8] sm:$0xff]
  %v40 = vld [vmem:[%s1 + $0x10] sm:$0xff]
  %v41 = vld [vmem:[%s1 + $0x18] sm:$0xff]
  %v42 = vld [vmem:[%s2] sm:$0xf]
  %v44 = vlaneseq
  %v45 = vshrl.u32 %v44, 7
  %v46 = vsub.s32 0, %v45
  %v47 = vrot.slane %v42, %v46
  %v48 = vlaneseq
  %v49 = vshrl.u32 %v48, 7
  %v50 = vsub.s32 1, %v49
  %v51 = vrot.slane %v42, %v50
  %v52 = vlaneseq
  %v53 = vshrl.u32 %v52, 7
  %v54 = vsub.s32 2, %v53
  %v55 = vrot.slane %v42, %v54
  %v56 = vlaneseq
  %v57 = vshrl.u32 %v56, 7
  %v58 = vsub.s32 3, %v57
  %v59 = vrot.slane %v42, %v58
  %v72 = vunpack.c.l.b16 %v30
  %v73 = vunpack.c.l.b16 %v31
  %v74 = vunpack.c.l.b16 %v32
  %v75 = vunpack.c.l.b16 %v33
  %v76 = vunpack.c.l.b16 %v34
  %v77 = vunpack.c.l.b16 %v35
  %v78 = vunpack.c.l.b16 %v36
  %v79 = vunpack.c.l.b16 %v37
  %v80 = vpack.c.b16 %v73, %v72
  %v81 = vpack.c.b16 %v75, %v74
  %v82 = vpack.c.b16 %v77, %v76
  %v83 = vpack.c.b16 %v79, %v78
  %v88 = vunpack.c.l.b16 %v38
  %v89 = vunpack.c.h.b16 %v38
  %v90 = vunpack.c.l.b16 %v39
  %v91 = vunpack.c.h.b16 %v39
  %v92 = vunpack.c.l.b16 %v40
  %v93 = vunpack.c.h.b16 %v40
  %v94 = vunpack.c.l.b16 %v41
  %v95 = vunpack.c.h.b16 %v41
  %v96 = vpack.c.b16 %v92, %v88
  %v97 = vpack.c.b16 %v93, %v89
  %v98 = vpack.c.b16 %v94, %v90
  %v99 = vpack.c.b16 %v95, %v91
  %vm104 = vcmask 130048
  %v106 = vsel %vm104, %v80, 0
  %v109 = vsel %vm104, %v81, 0
  %v112 = vsel %vm104, %v82, 0
  %v115 = vsel %vm104, %v83, 0
  %117 = vmatprep.subr.bf16.mxu0 0
  %118 = vmatpush1.bf16.msra.mxu0 0
  %119 = vmatprep.subr.bf16.mxu0 0
  %120 = vmatpush1.bf16.msra.mxu0 0
  %121 = vmatprep.subr.bf16.mxu0 0
  %122 = vmatpush1.bf16.msra.mxu0 0
  %123 = vmatprep.subr.bf16.mxu0 0
  %124 = vmatpush1.bf16.msra.mxu0 0
  %125 = vmatprep.subr.bf16.mxu0 0
  %126 = vmatpush1.bf16.msra.mxu0 0
  %127 = vmatprep.subr.bf16.mxu0 0
  %128 = vmatpush1.bf16.msra.mxu0 0
  %129 = vmatprep.subr.bf16.mxu0 0
  %130 = vmatpush1.bf16.msra.mxu0 0
  %131 = vmatprep.subr.bf16.mxu0 %v97
  %132 = vmatpush1.bf16.msra.mxu0 %v96
  %133 = vmatprep.subr.bf16.mxu0 0
  %134 = vmatpush2.bf16.msra.mxu0 0
  %135 = vmatprep.subr.bf16.mxu0 0
  %136 = vmatpush2.bf16.msra.mxu0 0
  %137 = vmatprep.subr.bf16.mxu0 0
  %138 = vmatpush2.bf16.msra.mxu0 0
  %139 = vmatprep.subr.bf16.mxu0 0
  %140 = vmatpush2.bf16.msra.mxu0 0
  %141 = vmatprep.subr.bf16.mxu0 0
  %142 = vmatpush2.bf16.msra.mxu0 0
  %143 = vmatprep.subr.bf16.mxu0 0
  %144 = vmatpush2.bf16.msra.mxu0 0
  %145 = vmatprep.subr.bf16.mxu0 0
  %146 = vmatpush2.bf16.msra.mxu0 0
  %147 = vmatprep.subr.bf16.mxu0 0
  %148 = vmatpush2.bf16.msra.mxu0 0
  %149 = vmatprep.mubr.bf16.mxu0 0
  %150 = vmatmul.mubr.bf16.gmra.mxu0 %v106
  %v151 = vpop.f32.mrf.mxu0
  %v152 = vadd.f32 %v47, %v151
  %v153 = vpop.f32.mrf.mxu0
  %v154 = vadd.f32 %v51, %v153
  %v155 = vpop.f32.mrf.mxu0
  %v156 = vadd.f32 %v47, %v155
  %v157 = vpop.f32.mrf.mxu0
  %v158 = vadd.f32 %v51, %v157
  %159 = vmatprep.mubr.bf16.mxu0 0
  %160 = vmatmul.mubr.bf16.gmra.mxu0 %v109
  %v161 = vpop.f32.mrf.mxu0
  %v162 = vadd.f32 %v47, %v161
  %v163 = vpop.f32.mrf.mxu0
  %v164 = vadd.f32 %v51, %v163
  %v165 = vpop.f32.mrf.mxu0
  %v166 = vadd.f32 %v47, %v165
  %v167 = vpop.f32.mrf.mxu0
  %v168 = vadd.f32 %v51, %v167
  %169 = vmatprep.mubr.bf16.mxu0 0
  %170 = vmatmul.mubr.bf16.gmra.mxu0 %v112
  %v171 = vpop.f32.mrf.mxu0
  %v172 = vadd.f32 %v47, %v171
  %v173 = vpop.f32.mrf.mxu0
  %v174 = vadd.f32 %v51, %v173
  %v175 = vpop.f32.mrf.mxu0
  %v176 = vadd.f32 %v47, %v175
  %v177 = vpop.f32.mrf.mxu0
  %v178 = vadd.f32 %v51, %v177
  %179 = vmatprep.mubr.bf16.mxu0 0
  %180 = vmatmul.mubr.bf16.gmra.mxu0 %v115
  %v181 = vpop.f32.mrf.mxu0
  %v182 = vadd.f32 %v47, %v181
  %v183 = vpop.f32.mrf.mxu0
  %v184 = vadd.f32 %v51, %v183
  %v185 = vpop.f32.mrf.mxu0
  %v186 = vadd.f32 %v47, %v185
  %v187 = vpop.f32.mrf.mxu0
  %v188 = vadd.f32 %v51, %v187
  %189 = vdwg.mxu0
  %190 = vmatprep.subr.bf16.mxu0 0
  %191 = vmatpush1.bf16.msra.mxu0 0
  %192 = vmatprep.subr.bf16.mxu0 0
  %193 = vmatpush1.bf16.msra.mxu0 0
  %194 = vmatprep.subr.bf16.mxu0 0
  %195 = vmatpush1.bf16.msra.mxu0 0
  %196 = vmatprep.subr.bf16.mxu0 0
  %197 = vmatpush1.bf16.msra.mxu0 0
  %198 = vmatprep.subr.bf16.mxu0 0
  %199 = vmatpush1.bf16.msra.mxu0 0
  %200 = vmatprep.subr.bf16.mxu0 0
  %201 = vmatpush1.bf16.msra.mxu0 0
  %202 = vmatprep.subr.bf16.mxu0 0
  %203 = vmatpush1.bf16.msra.mxu0 0
  %204 = vmatprep.subr.bf16.mxu0 %v99
  %205 = vmatpush1.bf16.msra.mxu0 %v98
  %206 = vmatprep.subr.bf16.mxu0 0
  %207 = vmatpush2.bf16.msra.mxu0 0
  %208 = vmatprep.subr.bf16.mxu0 0
  %209 = vmatpush2.bf16.msra.mxu0 0
  %210 = vmatprep.subr.bf16.mxu0 0
  %211 = vmatpush2.bf16.msra.mxu0 0
  %212 = vmatprep.subr.bf16.mxu0 0
  %213 = vmatpush2.bf16.msra.mxu0 0
  %214 = vmatprep.subr.bf16.mxu0 0
  %215 = vmatpush2.bf16.msra.mxu0 0
  %216 = vmatprep.subr.bf16.mxu0 0
  %217 = vmatpush2.bf16.msra.mxu0 0
  %218 = vmatprep.subr.bf16.mxu0 0
  %219 = vmatpush2.bf16.msra.mxu0 0
  %220 = vmatprep.subr.bf16.mxu0 0
  %221 = vmatpush2.bf16.msra.mxu0 0
  %222 = vmatprep.mubr.bf16.mxu0 0
  %223 = vmatmul.mubr.bf16.gmra.mxu0 %v106
  %v224 = vpop.f32.mrf.mxu0
  %v225 = vadd.f32 %v55, %v224
  %v226 = vpop.f32.mrf.mxu0
  %v227 = vadd.f32 %v59, %v226
  %v228 = vpop.f32.mrf.mxu0
  %v229 = vadd.f32 %v55, %v228
  %v230 = vpop.f32.mrf.mxu0
  %v231 = vadd.f32 %v59, %v230
  %232 = vmatprep.mubr.bf16.mxu0 0
  %233 = vmatmul.mubr.bf16.gmra.mxu0 %v109
  %v234 = vpop.f32.mrf.mxu0
  %v235 = vadd.f32 %v55, %v234
  %v236 = vpop.f32.mrf.mxu0
  %v237 = vadd.f32 %v59, %v236
  %v238 = vpop.f32.mrf.mxu0
  %v239 = vadd.f32 %v55, %v238
  %v240 = vpop.f32.mrf.mxu0
  %v241 = vadd.f32 %v59, %v240
  %242 = vmatprep.mubr.bf16.mxu0 0
  %243 = vmatmul.mubr.bf16.gmra.mxu0 %v112
  %v244 = vpop.f32.mrf.mxu0
  %v245 = vadd.f32 %v55, %v244
  %v246 = vpop.f32.mrf.mxu0
  %v247 = vadd.f32 %v59, %v246
  %v248 = vpop.f32.mrf.mxu0
  %v249 = vadd.f32 %v55, %v248
  %v250 = vpop.f32.mrf.mxu0
  %v251 = vadd.f32 %v59, %v250
  %252 = vmatprep.mubr.bf16.mxu0 0
  %253 = vmatmul.mubr.bf16.gmra.mxu0 %v115
  %v254 = vpop.f32.mrf.mxu0
  %v255 = vadd.f32 %v55, %v254
  %v256 = vpop.f32.mrf.mxu0
  %v257 = vadd.f32 %v59, %v256
  %v258 = vpop.f32.mrf.mxu0
  %v259 = vadd.f32 %v55, %v258
  %v260 = vpop.f32.mrf.mxu0
  %v261 = vadd.f32 %v59, %v260
  %262 = vdwg.mxu0
  %263 = vst [vmem:[#allocation2] sm:$0xff] %v152
  %264 = vst [vmem:[#allocation2 + $0x8] sm:$0xff] %v154
  %265 = vst [vmem:[#allocation2 + $0x10] sm:$0xff] %v225
  %266 = vst [vmem:[#allocation2 + $0x18] sm:$0xff] %v227
  %267 = vst [vmem:[#allocation2 + $0x20] sm:$0xff] %v156
  %268 = vst [vmem:[#allocation2 + $0x28] sm:$0xff] %v158
  %269 = vst [vmem:[#allocation2 + $0x30] sm:$0xff] %v229
  %270 = vst [vmem:[#allocation2 + $0x38] sm:$0xff] %v231
  %271 = vst [vmem:[#allocation2 + $0x40] sm:$0xff] %v162
  %272 = vst [vmem:[#allocation2 + $0x48] sm:$0xff] %v164
  %273 = vst [vmem:[#allocation2 + $0x50] sm:$0xff] %v235
  %274 = vst [vmem:[#allocation2 + $0x58] sm:$0xff] %v237
  %275 = vst [vmem:[#allocation2 + $0x60] sm:$0xff] %v166
  %276 = vst [vmem:[#allocation2 + $0x68] sm:$0xff] %v168
  %277 = vst [vmem:[#allocation2 + $0x70] sm:$0xff] %v239
  %278 = vst [vmem:[#allocation2 + $0x78] sm:$0xff] %v241
  %279 = vst [vmem:[#allocation2 + $0x80] sm:$0xff] %v172
  %280 = vst [vmem:[#allocation2 + $0x88] sm:$0xff] %v174
  %281 = vst [vmem:[#allocation2 + $0x90] sm:$0xff] %v245
  %282 = vst [vmem:[#allocation2 + $0x98] sm:$0xff] %v247
  %283 = vst [vmem:[#allocation2 + $0xa0] sm:$0xff] %v176
  %284 = vst [vmem:[#allocation2 + $0xa8] sm:$0xff] %v178
  %285 = vst [vmem:[#allocation2 + $0xb0] sm:$0xff] %v249
  %286 = vst [vmem:[#allocation2 + $0xb8] sm:$0xff] %v251
  %287 = vst [vmem:[#allocation2 + $0xc0] sm:$0xff] %v182
  %288 = vst [vmem:[#allocation2 + $0xc8] sm:$0xff] %v184
  %289 = vst [vmem:[#allocation2 + $0xd0] sm:$0xff] %v255
  %290 = vst [vmem:[#allocation2 + $0xd8] sm:$0xff] %v257
  %291 = vst [vmem:[#allocation2 + $0xe0] sm:$0xff] %v186
  %292 = vst [vmem:[#allocation2 + $0xe8] sm:$0xff] %v188
  %293 = vst [vmem:[#allocation2 + $0xf0] sm:$0xff] %v259
  %294 = vst [vmem:[#allocation2 + $0xf8] sm:$0xff] %v261
  %v295 = vld [vmem:[%s3] sm:$0xff]
  %v296 = vld [vmem:[%s3 + $0x8] sm:$0xff]
  %v297 = vld [vmem:[%s3 + $0x10] sm:$0xff]
  %v298 = vld [vmem:[%s3 + $0x18] sm:$0xff]
  %v299 = vld [vmem:[%s3 + $0x20] sm:$0xff]
  %v300 = vld [vmem:[%s3 + $0x28] sm:$0xff]
  %v301 = vld [vmem:[%s3 + $0x30] sm:$0xff]
  %v302 = vld [vmem:[%s3 + $0x38] sm:$0xff]
  %v303 = vld [vmem:[%s3 + $0x40] sm:$0xff]
  %v304 = vld [vmem:[%s3 + $0x48] sm:$0xff]
  %v305 = vld [vmem:[%s3 + $0x50] sm:$0xff]
  %v306 = vld [vmem:[%s3 + $0x58] sm:$0xff]
  %v307 = vld [vmem:[%s3 + $0x60] sm:$0xff]
  %v308 = vld [vmem:[%s3 + $0x68] sm:$0xff]
  %v309 = vld [vmem:[%s3 + $0x70] sm:$0xff]
  %v310 = vld [vmem:[%s3 + $0x78] sm:$0xff]
  %v311 = vld [vmem:[%s3 + $0x80] sm:$0xff]
  %v312 = vld [vmem:[%s3 + $0x88] sm:$0xff]
  %v313 = vld [vmem:[%s3 + $0x90] sm:$0xff]
  %v314 = vld [vmem:[%s3 + $0x98] sm:$0xff]
  %v315 = vld [vmem:[%s3 + $0xa0] sm:$0xff]
  %v316 = vld [vmem:[%s3 + $0xa8] sm:$0xff]
  %v317 = vld [vmem:[%s3 + $0xb0] sm:$0xff]
  %v318 = vld [vmem:[%s3 + $0xb8] sm:$0xff]
  %v319 = vld [vmem:[%s3 + $0xc0] sm:$0xff]
  %v320 = vld [vmem:[%s3 + $0xc8] sm:$0xff]
  %v321 = vld [vmem:[%s3 + $0xd0] sm:$0xff]
  %v322 = vld [vmem:[%s3 + $0xd8] sm:$0xff]
  %v323 = vld [vmem:[%s3 + $0xe0] sm:$0xff]
  %v324 = vld [vmem:[%s3 + $0xe8] sm:$0xff]
  %v325 = vld [vmem:[%s3 + $0xf0] sm:$0xff]
  %v326 = vld [vmem:[%s3 + $0xf8] sm:$0xff]
  %v327 = vld [vmem:[#allocation3] sm:$0xff]
  %v328 = vld [vmem:[#allocation4] sm:$0xff]
  %s329 = smul.u32 0, 4
  %s330 = smul.addr %s329, 8
  %s331 = scalar_lea.vmem [#allocation2], %s330
  %v332 = vld [vmem:[%s331] sm:$0xff]
  %v333 = vld [vmem:[%s331 + $0x8] sm:$0xff]
  %v334 = vld [vmem:[%s331 + $0x10] sm:$0xff]
  %v335 = vld [vmem:[%s331 + $0x18] sm:$0xff]
  %v336 = vpack.c.bf16 %v327, %v327
  %v369 = vunpack.c.l.b16 %v295
  %v370 = vunpack.c.h.b16 %v295
  %v371 = vunpack.c.l.b16 %v296
  %v372 = vunpack.c.h.b16 %v296
  %v373 = vunpack.c.l.b16 %v297
  %v374 = vunpack.c.h.b16 %v297
  %v375 = vunpack.c.l.b16 %v298
  %v376 = vunpack.c.h.b16 %v298
  %v377 = vunpack.c.l.b16 %v299
  %v378 = vunpack.c.h.b16 %v299
  %v379 = vunpack.c.l.b16 %v300
  %v380 = vunpack.c.h.b16 %v300
  %v381 = vunpack.c.l.b16 %v301
  %v382 = vunpack.c.h.b16 %v301
  %v383 = vunpack.c.l.b16 %v302
  %v384 = vunpack.c.h.b16 %v302
  %v385 = vunpack.c.l.b16 %v303
  %v386 = vunpack.c.h.b16 %v303
  %v387 = vunpack.c.l.b16 %v304
  %v388 = vunpack.c.h.b16 %v304
  %v389 = vunpack.c.l.b16 %v305
  %v390 = vunpack.c.h.b16 %v305
  %v391 = vunpack.c.l.b16 %v306
  %v392 = vunpack.c.h.b16 %v306
  %v393 = vunpack.c.l.b16 %v307
  %v394 = vunpack.c.h.b16 %v307
  %v395 = vunpack.c.l.b16 %v308
  %v396 = vunpack.c.h.b16 %v308
  %v397 = vunpack.c.l.b16 %v309
  %v398 = vunpack.c.h.b16 %v309
  %v399 = vunpack.c.l.b16 %v310
  %v400 = vunpack.c.h.b16 %v310
  %v401 = vunpack.c.l.b16 %v311
  %v402 = vunpack.c.h.b16 %v311
  %v403 = vunpack.c.l.b16 %v312
  %v404 = vunpack.c.h.b16 %v312
  %v405 = vunpack.c.l.b16 %v313
  %v406 = vunpack.c.h.b16 %v313
  %v407 = vunpack.c.l.b16 %v314
  %v408 = vunpack.c.h.b16 %v314
  %v409 = vunpack.c.l.b16 %v315
  %v410 = vunpack.c.h.b16 %v315
  %v411 = vunpack.c.l.b16 %v316
  %v412 = vunpack.c.h.b16 %v316
  %v413 = vunpack.c.l.b16 %v317
  %v414 = vunpack.c.h.b16 %v317
  %v415 = vunpack.c.l.b16 %v318
  %v416 = vunpack.c.h.b16 %v318
  %v417 = vunpack.c.l.b16 %v319
  %v418 = vunpack.c.h.b16 %v319
  %v419 = vunpack.c.l.b16 %v320
  %v420 = vunpack.c.h.b16 %v320
  %v421 = vunpack.c.l.b16 %v321
  %v422 = vunpack.c.h.b16 %v321
  %v423 = vunpack.c.l.b16 %v322
  %v424 = vunpack.c.h.b16 %v322
  %v425 = vunpack.c.l.b16 %v323
  %v426 = vunpack.c.h.b16 %v323
  %v427 = vunpack.c.l.b16 %v324
  %v428 = vunpack.c.h.b16 %v324
  %v429 = vunpack.c.l.b16 %v325
  %v430 = vunpack.c.h.b16 %v325
  %v431 = vunpack.c.l.b16 %v326
  %v432 = vunpack.c.h.b16 %v326
  %v433 = vpack.c.b16 %v373, %v369
  %v434 = vpack.c.b16 %v374, %v370
  %v435 = vpack.c.b16 %v375, %v371
  %v436 = vpack.c.b16 %v376, %v372
  %v437 = vpack.c.b16 %v381, %v377
  %v438 = vpack.c.b16 %v382, %v378
  %v439 = vpack.c.b16 %v383, %v379
  %v440 = vpack.c.b16 %v384, %v380
  %v441 = vpack.c.b16 %v389, %v385
  %v442 = vpack.c.b16 %v390, %v386
  %v443 = vpack.c.b16 %v391, %v387
  %v444 = vpack.c.b16 %v392, %v388
  %v445 = vpack.c.b16 %v397, %v393
  %v446 = vpack.c.b16 %v398, %v394
  %v447 = vpack.c.b16 %v399, %v395
  %v448 = vpack.c.b16 %v400, %v396
  %v449 = vpack.c.b16 %v405, %v401
  %v450 = vpack.c.b16 %v406, %v402
  %v451 = vpack.c.b16 %v407, %v403
  %v452 = vpack.c.b16 %v408, %v404
  %v453 = vpack.c.b16 %v413, %v409
  %v454 = vpack.c.b16 %v414, %v410
  %v455 = vpack.c.b16 %v415, %v411
  %v456 = vpack.c.b16 %v416, %v412
  %v457 = vpack.c.b16 %v421, %v417
  %v458 = vpack.c.b16 %v422, %v418
  %v459 = vpack.c.b16 %v423, %v419
  %v460 = vpack.c.b16 %v424, %v420
  %v461 = vpack.c.b16 %v429, %v425
  %v462 = vpack.c.b16 %v430, %v426
  %v463 = vpack.c.b16 %v431, %v427
  %v464 = vpack.c.b16 %v432, %v428
  %497 = vmatprep.subr.bf16.mxu0 %v462
  %498 = vmatpush1.bf16.msra.mxu0 %v461
  %499 = vmatprep.subr.bf16.mxu0 %v458
  %500 = vmatpush1.bf16.msra.mxu0 %v457
  %501 = vmatprep.subr.bf16.mxu0 %v454
  %502 = vmatpush1.bf16.msra.mxu0 %v453
  %503 = vmatprep.subr.bf16.mxu0 %v450
  %504 = vmatpush1.bf16.msra.mxu0 %v449
  %505 = vmatprep.subr.bf16.mxu0 %v446
  %506 = vmatpush1.bf16.msra.mxu0 %v445
  %507 = vmatprep.subr.bf16.mxu0 %v442
  %508 = vmatpush1.bf16.msra.mxu0 %v441
  %509 = vmatprep.subr.bf16.mxu0 %v438
  %510 = vmatpush1.bf16.msra.mxu0 %v437
  %511 = vmatprep.subr.bf16.mxu0 %v434
  %512 = vmatpush1.bf16.msra.mxu0 %v433
  %513 = vmatprep.subr.bf16.mxu0 0
  %514 = vmatpush2.bf16.msra.mxu0 0
  %515 = vmatprep.subr.bf16.mxu0 0
  %516 = vmatpush2.bf16.msra.mxu0 0
  %517 = vmatprep.subr.bf16.mxu0 0
  %518 = vmatpush2.bf16.msra.mxu0 0
  %519 = vmatprep.subr.bf16.mxu0 0
  %520 = vmatpush2.bf16.msra.mxu0 0
  %521 = vmatprep.subr.bf16.mxu0 0
  %522 = vmatpush2.bf16.msra.mxu0 0
  %523 = vmatprep.subr.bf16.mxu0 0
  %524 = vmatpush2.bf16.msra.mxu0 0
  %525 = vmatprep.subr.bf16.mxu0 0
  %526 = vmatpush2.bf16.msra.mxu0 0
  %527 = vmatprep.subr.bf16.mxu0 0
  %528 = vmatpush2.bf16.msra.mxu0 0
  %529 = vmatprep.mubr.bf16.mxu0 0
  %530 = vmatmul.mubr.bf16.gmra.mxu0 %v336
  %v531 = vpop.f32.mrf.mxu0
  %v532 = vadd.f32 0.0, %v531
  %v533 = vpop.f32.mrf.mxu0
  %v534 = vadd.f32 0.0, %v533
  %v535 = vpop.f32.mrf.mxu0
  %v536 = vpop.f32.mrf.mxu0
  %537 = vdwg.mxu0
  %538 = vmatprep.subr.bf16.mxu0 %v464
  %539 = vmatpush1.bf16.msra.mxu0 %v463
  %540 = vmatprep.subr.bf16.mxu0 %v460
  %541 = vmatpush1.bf16.msra.mxu0 %v459
  %542 = vmatprep.subr.bf16.mxu0 %v456
  %543 = vmatpush1.bf16.msra.mxu0 %v455
  %544 = vmatprep.subr.bf16.mxu0 %v452
  %545 = vmatpush1.bf16.msra.mxu0 %v451
  %546 = vmatprep.subr.bf16.mxu0 %v448
  %547 = vmatpush1.bf16.msra.mxu0 %v447
  %548 = vmatprep.subr.bf16.mxu0 %v444
  %549 = vmatpush1.bf16.msra.mxu0 %v443
  %550 = vmatprep.subr.bf16.mxu0 %v440
  %551 = vmatpush1.bf16.msra.mxu0 %v439
  %552 = vmatprep.subr.bf16.mxu0 %v436
  %553 = vmatpush1.bf16.msra.mxu0 %v435
  %554 = vmatprep.subr.bf16.mxu0 0
  %555 = vmatpush2.bf16.msra.mxu0 0
  %556 = vmatprep.subr.bf16.mxu0 0
  %557 = vmatpush2.bf16.msra.mxu0 0
  %558 = vmatprep.subr.bf16.mxu0 0
  %559 = vmatpush2.bf16.msra.mxu0 0
  %560 = vmatprep.subr.bf16.mxu0 0
  %561 = vmatpush2.bf16.msra.mxu0 0
  %562 = vmatprep.subr.bf16.mxu0 0
  %563 = vmatpush2.bf16.msra.mxu0 0
  %564 = vmatprep.subr.bf16.mxu0 0
  %565 = vmatpush2.bf16.msra.mxu0 0
  %566 = vmatprep.subr.bf16.mxu0 0
  %567 = vmatpush2.bf16.msra.mxu0 0
  %568 = vmatprep.subr.bf16.mxu0 0
  %569 = vmatpush2.bf16.msra.mxu0 0
  %570 = vmatprep.mubr.bf16.mxu0 0
  %571 = vmatmul.mubr.bf16.gmra.mxu0 %v336
  %v572 = vpop.f32.mrf.mxu0
  %v573 = vadd.f32 0.0, %v572
  %v574 = vpop.f32.mrf.mxu0
  %v575 = vadd.f32 0.0, %v574
  %v576 = vpop.f32.mrf.mxu0
  %v577 = vpop.f32.mrf.mxu0
  %578 = vdwg.mxu0
  %v579 = vadd.f32 %v332, %v532
  %v580 = vadd.f32 %v333, %v534
  %v581 = vadd.f32 %v334, %v573
  %v582 = vadd.f32 %v335, %v575
  %v583 = vxor.u32 %v579, 2147483648
  %v584 = vmul.f32 %v583, 1.442695
  %v585 = vpow.pop %v584
  %v586 = vadd.f32 %v585, 1.0
  %v587 = vrcp.pop %v586
  %v588 = vmul.f32 1.0, %v587
  %v589 = vxor.u32 %v580, 2147483648
  %v590 = vmul.f32 %v589, 1.442695
  %v591 = vpow.pop %v590
  %v592 = vadd.f32 %v591, 1.0
  %v593 = vrcp.pop %v592
  %v594 = vmul.f32 1.0, %v593
  %v595 = vtanh.pop %v581
  %v596 = vxor.u32 %v582, 2147483648
  %v597 = vmul.f32 %v596, 1.442695
  %v598 = vpow.pop %v597
  %v599 = vadd.f32 %v598, 1.0
  %v600 = vrcp.pop %v599
  %v601 = vmul.f32 1.0, %v600
  %v602 = vmul.f32 %v594, %v328
  %v603 = vmul.f32 %v588, %v595
  %v604 = vadd.f32 %v602, %v603
  %v605 = vtanh.pop %v604
  %v606 = vmul.f32 %v601, %v605
  %s607 = smul.u32 1, 4
  %s608 = smul.addr %s607, 8
  %s609 = scalar_lea.vmem [#allocation2], %s608
  %v610 = vld [vmem:[%s609] sm:$0xff]
  %v611 = vld [vmem:[%s609 + $0x8] sm:$0xff]
  %v612 = vld [vmem:[%s609 + $0x10] sm:$0xff]
  %v613 = vld [vmem:[%s609 + $0x18] sm:$0xff]
  %v614 = vpack.c.bf16 %v606, %v606
  %615 = vmatprep.subr.bf16.mxu0 %v462
  %616 = vmatpush1.bf16.msra.mxu0 %v461
  %617 = vmatprep.subr.bf16.mxu0 %v458
  %618 = vmatpush1.bf16.msra.mxu0 %v457
  %619 = vmatprep.subr.bf16.mxu0 %v454
  %620 = vmatpush1.bf16.msra.mxu0 %v453
  %621 = vmatprep.subr.bf16.mxu0 %v450
  %622 = vmatpush1.bf16.msra.mxu0 %v449
  %623 = vmatprep.subr.bf16.mxu0 %v446
  %624 = vmatpush1.bf16.msra.mxu0 %v445
  %625 = vmatprep.subr.bf16.mxu0 %v442
  %626 = vmatpush1.bf16.msra.mxu0 %v441
  %627 = vmatprep.subr.bf16.mxu0 %v438
  %628 = vmatpush1.bf16.msra.mxu0 %v437
  %629 = vmatprep.subr.bf16.mxu0 %v434
  %630 = vmatpush1.bf16.msra.mxu0 %v433
  %631 = vmatprep.subr.bf16.mxu0 0
  %632 = vmatpush2.bf16.msra.mxu0 0
  %633 = vmatprep.subr.bf16.mxu0 0
  %634 = vmatpush2.bf16.msra.mxu0 0
  %635 = vmatprep.subr.bf16.mxu0 0
  %636 = vmatpush2.bf16.msra.mxu0 0
  %637 = vmatprep.subr.bf16.mxu0 0
  %638 = vmatpush2.bf16.msra.mxu0 0
  %639 = vmatprep.subr.bf16.mxu0 0
  %640 = vmatpush2.bf16.msra.mxu0 0
  %641 = vmatprep.subr.bf16.mxu0 0
  %642 = vmatpush2.bf16.msra.mxu0 0
  %643 = vmatprep.subr.bf16.mxu0 0
  %644 = vmatpush2.bf16.msra.mxu0 0
  %645 = vmatprep.subr.bf16.mxu0 0
  %646 = vmatpush2.bf16.msra.mxu0 0
  %647 = vmatprep.mubr.bf16.mxu0 0
  %648 = vmatmul.mubr.bf16.gmra.mxu0 %v614
  %v649 = vpop.f32.mrf.mxu0
  %v650 = vadd.f32 0.0, %v649
  %v651 = vpop.f32.mrf.mxu0
  %v652 = vadd.f32 0.0, %v651
  %v653 = vpop.f32.mrf.mxu0
  %v654 = vpop.f32.mrf.mxu0
  %655 = vdwg.mxu0
  %656 = vmatprep.subr.bf16.mxu0 %v464
  %657 = vmatpush1.bf16.msra.mxu0 %v463
  %658 = vmatprep.subr.bf16.mxu0 %v460
  %659 = vmatpush1.bf16.msra.mxu0 %v459
  %660 = vmatprep.subr.bf16.mxu0 %v456
  %661 = vmatpush1.bf16.msra.mxu0 %v455
  %662 = vmatprep.subr.bf16.mxu0 %v452
  %663 = vmatpush1.bf16.msra.mxu0 %v451
  %664 = vmatprep.subr.bf16.mxu0 %v448
  %665 = vmatpush1.bf16.msra.mxu0 %v447
  %666 = vmatprep.subr.bf16.mxu0 %v444
  %667 = vmatpush1.bf16.msra.mxu0 %v443
  %668 = vmatprep.subr.bf16.mxu0 %v440
  %669 = vmatpush1.bf16.msra.mxu0 %v439
  %670 = vmatprep.subr.bf16.mxu0 %v436
  %671 = vmatpush1.bf16.msra.mxu0 %v435
  %672 = vmatprep.subr.bf16.mxu0 0
  %673 = vmatpush2.bf16.msra.mxu0 0
  %674 = vmatprep.subr.bf16.mxu0 0
  %675 = vmatpush2.bf16.msra.mxu0 0
  %676 = vmatprep.subr.bf16.mxu0 0
  %677 = vmatpush2.bf16.msra.mxu0 0
  %678 = vmatprep.subr.bf16.mxu0 0
  %679 = vmatpush2.bf16.msra.mxu0 0
  %680 = vmatprep.subr.bf16.mxu0 0
  %681 = vmatpush2.bf16.msra.mxu0 0
  %682 = vmatprep.subr.bf16.mxu0 0
  %683 = vmatpush2.bf16.msra.mxu0 0
  %684 = vmatprep.subr.bf16.mxu0 0
  %685 = vmatpush2.bf16.msra.mxu0 0
  %686 = vmatprep.subr.bf16.mxu0 0
  %687 = vmatpush2.bf16.msra.mxu0 0
  %688 = vmatprep.mubr.bf16.mxu0 0
  %689 = vmatmul.mubr.bf16.gmra.mxu0 %v614
  %v690 = vpop.f32.mrf.mxu0
  %v691 = vadd.f32 0.0, %v690
  %v692 = vpop.f32.mrf.mxu0
  %v693 = vadd.f32 0.0, %v692
  %v694 = vpop.f32.mrf.mxu0
  %v695 = vpop.f32.mrf.mxu0
  %696 = vdwg.mxu0
  %v697 = vadd.f32 %v610, %v650
  %v698 = vadd.f32 %v611, %v652
  %v699 = vadd.f32 %v612, %v691
  %v700 = vadd.f32 %v613, %v693
  %v701 = vxor.u32 %v697, 2147483648
  %v702 = vmul.f32 %v701, 1.442695
  %v703 = vpow.pop %v702
  %v704 = vadd.f32 %v703, 1.0
  %v705 = vrcp.pop %v704
  %v706 = vmul.f32 1.0, %v705
  %v707 = vxor.u32 %v698, 2147483648
  %v708 = vmul.f32 %v707, 1.442695
  %v709 = vpow.pop %v708
  %v710 = vadd.f32 %v709, 1.0
  %v711 = vrcp.pop %v710
  %v712 = vmul.f32 1.0, %v711
  %v713 = vtanh.pop %v699
  %v714 = vxor.u32 %v700, 2147483648
  %v715 = vmul.f32 %v714, 1.442695
  %v716 = vpow.pop %v715
  %v717 = vadd.f32 %v716, 1.0
  %v718 = vrcp.pop %v717
  %v719 = vmul.f32 1.0, %v718
  %v720 = vmul.f32 %v712, %v604
  %v721 = vmul.f32 %v706, %v713
  %v722 = vadd.f32 %v720, %v721
  %v723 = vtanh.pop %v722
  %v724 = vmul.f32 %v719, %v723
  %s725 = smul.u32 2, 4
  %s726 = smul.addr %s725, 8
  %s727 = scalar_lea.vmem [#allocation2], %s726
  %v728 = vld [vmem:[%s727] sm:$0xff]
  %v729 = vld [vmem:[%s727 + $0x8] sm:$0xff]
  %v730 = vld [vmem:[%s727 + $0x10] sm:$0xff]
  %v731 = vld [vmem:[%s727 + $0x18] sm:$0xff]
  %v732 = vpack.c.bf16 %v724, %v724
  %733 = vmatprep.subr.bf16.mxu0 %v462
  %734 = vmatpush1.bf16.msra.mxu0 %v461
  %735 = vmatprep.subr.bf16.mxu0 %v458
  %736 = vmatpush1.bf16.msra.mxu0 %v457
  %737 = vmatprep.subr.bf16.mxu0 %v454
  %738 = vmatpush1.bf16.msra.mxu0 %v453
  %739 = vmatprep.subr.bf16.mxu0 %v450
  %740 = vmatpush1.bf16.msra.mxu0 %v449
  %741 = vmatprep.subr.bf16.mxu0 %v446
  %742 = vmatpush1.bf16.msra.mxu0 %v445
  %743 = vmatprep.subr.bf16.mxu0 %v442
  %744 = vmatpush1.bf16.msra.mxu0 %v441
  %745 = vmatprep.subr.bf16.mxu0 %v438
  %746 = vmatpush1.bf16.msra.mxu0 %v437
  %747 = vmatprep.subr.bf16.mxu0 %v434
  %748 = vmatpush1.bf16.msra.mxu0 %v433
  %749 = vmatprep.subr.bf16.mxu0 0
  %750 = vmatpush2.bf16.msra.mxu0 0
  %751 = vmatprep.subr.bf16.mxu0 0
  %752 = vmatpush2.bf16.msra.mxu0 0
  %753 = vmatprep.subr.bf16.mxu0 0
  %754 = vmatpush2.bf16.msra.mxu0 0
  %755 = vmatprep.subr.bf16.mxu0 0
  %756 = vmatpush2.bf16.msra.mxu0 0
  %757 = vmatprep.subr.bf16.mxu0 0
  %758 = vmatpush2.bf16.msra.mxu0 0
  %759 = vmatprep.subr.bf16.mxu0 0
  %760 = vmatpush2.bf16.msra.mxu0 0
  %761 = vmatprep.subr.bf16.mxu0 0
  %762 = vmatpush2.bf16.msra.mxu0 0
  %763 = vmatprep.subr.bf16.mxu0 0
  %764 = vmatpush2.bf16.msra.mxu0 0
  %765 = vmatprep.mubr.bf16.mxu0 0
  %766 = vmatmul.mubr.bf16.gmra.mxu0 %v732
  %v767 = vpop.f32.mrf.mxu0
  %v768 = vadd.f32 0.0, %v767
  %v769 = vpop.f32.mrf.mxu0
  %v770 = vadd.f32 0.0, %v769
  %v771 = vpop.f32.mrf.mxu0
  %v772 = vpop.f32.mrf.mxu0
  %773 = vdwg.mxu0
  %774 = vmatprep.subr.bf16.mxu0 %v464
  %775 = vmatpush1.bf16.msra.mxu0 %v463
  %776 = vmatprep.subr.bf16.mxu0 %v460
  %777 = vmatpush1.bf16.msra.mxu0 %v459
  %778 = vmatprep.subr.bf16.mxu0 %v456
  %779 = vmatpush1.bf16.msra.mxu0 %v455
  %780 = vmatprep.subr.bf16.mxu0 %v452
  %781 = vmatpush1.bf16.msra.mxu0 %v451
  %782 = vmatprep.subr.bf16.mxu0 %v448
  %783 = vmatpush1.bf16.msra.mxu0 %v447
  %784 = vmatprep.subr.bf16.mxu0 %v444
  %785 = vmatpush1.bf16.msra.mxu0 %v443
  %786 = vmatprep.subr.bf16.mxu0 %v440
  %787 = vmatpush1.bf16.msra.mxu0 %v439
  %788 = vmatprep.subr.bf16.mxu0 %v436
  %789 = vmatpush1.bf16.msra.mxu0 %v435
  %790 = vmatprep.subr.bf16.mxu0 0
  %791 = vmatpush2.bf16.msra.mxu0 0
  %792 = vmatprep.subr.bf16.mxu0 0
  %793 = vmatpush2.bf16.msra.mxu0 0
  %794 = vmatprep.subr.bf16.mxu0 0
  %795 = vmatpush2.bf16.msra.mxu0 0
  %796 = vmatprep.subr.bf16.mxu0 0
  %797 = vmatpush2.bf16.msra.mxu0 0
  %798 = vmatprep.subr.bf16.mxu0 0
  %799 = vmatpush2.bf16.msra.mxu0 0
  %800 = vmatprep.subr.bf16.mxu0 0
  %801 = vmatpush2.bf16.msra.mxu0 0
  %802 = vmatprep.subr.bf16.mxu0 0
  %803 = vmatpush2.bf16.msra.mxu0 0
  %804 = vmatprep.subr.bf16.mxu0 0
  %805 = vmatpush2.bf16.msra.mxu0 0
  %806 = vmatprep.mubr.bf16.mxu0 0
  %807 = vmatmul.mubr.bf16.gmra.mxu0 %v732
  %v808 = vpop.f32.mrf.mxu0
  %v809 = vadd.f32 0.0, %v808
  %v810 = vpop.f32.mrf.mxu0
  %v811 = vadd.f32 0.0, %v810
  %v812 = vpop.f32.mrf.mxu0
  %v813 = vpop.f32.mrf.mxu0
  %814 = vdwg.mxu0
  %v815 = vadd.f32 %v728, %v768
  %v816 = vadd.f32 %v729, %v770
  %v817 = vadd.f32 %v730, %v809
  %v818 = vadd.f32 %v731, %v811
  %v819 = vxor.u32 %v815, 2147483648
  %v820 = vmul.f32 %v819, 1.442695
  %v821 = vpow.pop %v820
  %v822 = vadd.f32 %v821, 1.0
  %v823 = vrcp.pop %v822
  %v824 = vmul.f32 1.0, %v823
  %v825 = vxor.u32 %v816, 2147483648
  %v826 = vmul.f32 %v825, 1.442695
  %v827 = vpow.pop %v826
  %v828 = vadd.f32 %v827, 1.0
  %v829 = vrcp.pop %v828
  %v830 = vmul.f32 1.0, %v829
  %v831 = vtanh.pop %v817
  %v832 = vxor.u32 %v818, 2147483648
  %v833 = vmul.f32 %v832, 1.442695
  %v834 = vpow.pop %v833
  %v835 = vadd.f32 %v834, 1.0
  %v836 = vrcp.pop %v835
  %v837 = vmul.f32 1.0, %v836
  %v838 = vmul.f32 %v830, %v722
  %v839 = vmul.f32 %v824, %v831
  %v840 = vadd.f32 %v838, %v839
  %v841 = vtanh.pop %v840
  %v842 = vmul.f32 %v837, %v841
  %s843 = smul.u32 3, 4
  %s844 = smul.addr %s843, 8
  %s845 = scalar_lea.vmem [#allocation2], %s844
  %v846 = vld [vmem:[%s845] sm:$0xff]
  %v847 = vld [vmem:[%s845 + $0x8] sm:$0xff]
  %v848 = vld [vmem:[%s845 + $0x10] sm:$0xff]
  %v849 = vld [vmem:[%s845 + $0x18] sm:$0xff]
  %v850 = vpack.c.bf16 %v842, %v842
  %851 = vmatprep.subr.bf16.mxu0 %v462
  %852 = vmatpush1.bf16.msra.mxu0 %v461
  %853 = vmatprep.subr.bf16.mxu0 %v458
  %854 = vmatpush1.bf16.msra.mxu0 %v457
  %855 = vmatprep.subr.bf16.mxu0 %v454
  %856 = vmatpush1.bf16.msra.mxu0 %v453
  %857 = vmatprep.subr.bf16.mxu0 %v450
  %858 = vmatpush1.bf16.msra.mxu0 %v449
  %859 = vmatprep.subr.bf16.mxu0 %v446
  %860 = vmatpush1.bf16.msra.mxu0 %v445
  %861 = vmatprep.subr.bf16.mxu0 %v442
  %862 = vmatpush1.bf16.msra.mxu0 %v441
  %863 = vmatprep.subr.bf16.mxu0 %v438
  %864 = vmatpush1.bf16.msra.mxu0 %v437
  %865 = vmatprep.subr.bf16.mxu0 %v434
  %866 = vmatpush1.bf16.msra.mxu0 %v433
  %867 = vmatprep.subr.bf16.mxu0 0
  %868 = vmatpush2.bf16.msra.mxu0 0
  %869 = vmatprep.subr.bf16.mxu0 0
  %870 = vmatpush2.bf16.msra.mxu0 0
  %871 = vmatprep.subr.bf16.mxu0 0
  %872 = vmatpush2.bf16.msra.mxu0 0
  %873 = vmatprep.subr.bf16.mxu0 0
  %874 = vmatpush2.bf16.msra.mxu0 0
  %875 = vmatprep.subr.bf16.mxu0 0
  %876 = vmatpush2.bf16.msra.mxu0 0
  %877 = vmatprep.subr.bf16.mxu0 0
  %878 = vmatpush2.bf16.msra.mxu0 0
  %879 = vmatprep.subr.bf16.mxu0 0
  %880 = vmatpush2.bf16.msra.mxu0 0
  %881 = vmatprep.subr.bf16.mxu0 0
  %882 = vmatpush2.bf16.msra.mxu0 0
  %883 = vmatprep.mubr.bf16.mxu0 0
  %884 = vmatmul.mubr.bf16.gmra.mxu0 %v850
  %v885 = vpop.f32.mrf.mxu0
  %v886 = vadd.f32 0.0, %v885
  %v887 = vpop.f32.mrf.mxu0
  %v888 = vadd.f32 0.0, %v887
  %v889 = vpop.f32.mrf.mxu0
  %v890 = vpop.f32.mrf.mxu0
  %891 = vdwg.mxu0
  %892 = vmatprep.subr.bf16.mxu0 %v464
  %893 = vmatpush1.bf16.msra.mxu0 %v463
  %894 = vmatprep.subr.bf16.mxu0 %v460
  %895 = vmatpush1.bf16.msra.mxu0 %v459
  %896 = vmatprep.subr.bf16.mxu0 %v456
  %897 = vmatpush1.bf16.msra.mxu0 %v455
  %898 = vmatprep.subr.bf16.mxu0 %v452
  %899 = vmatpush1.bf16.msra.mxu0 %v451
  %900 = vmatprep.subr.bf16.mxu0 %v448
  %901 = vmatpush1.bf16.msra.mxu0 %v447
  %902 = vmatprep.subr.bf16.mxu0 %v444
  %903 = vmatpush1.bf16.msra.mxu0 %v443
  %904 = vmatprep.subr.bf16.mxu0 %v440
  %905 = vmatpush1.bf16.msra.mxu0 %v439
  %906 = vmatprep.subr.bf16.mxu0 %v436
  %907 = vmatpush1.bf16.msra.mxu0 %v435
  %908 = vmatprep.subr.bf16.mxu0 0
  %909 = vmatpush2.bf16.msra.mxu0 0
  %910 = vmatprep.subr.bf16.mxu0 0
  %911 = vmatpush2.bf16.msra.mxu0 0
  %912 = vmatprep.subr.bf16.mxu0 0
  %913 = vmatpush2.bf16.msra.mxu0 0
  %914 = vmatprep.subr.bf16.mxu0 0
  %915 = vmatpush2.bf16.msra.mxu0 0
  %916 = vmatprep.subr.bf16.mxu0 0
  %917 = vmatpush2.bf16.msra.mxu0 0
  %918 = vmatprep.subr.bf16.mxu0 0
  %919 = vmatpush2.bf16.msra.mxu0 0
  %920 = vmatprep.subr.bf16.mxu0 0
  %921 = vmatpush2.bf16.msra.mxu0 0
  %922 = vmatprep.subr.bf16.mxu0 0
  %923 = vmatpush2.bf16.msra.mxu0 0
  %924 = vmatprep.mubr.bf16.mxu0 0
  %925 = vmatmul.mubr.bf16.gmra.mxu0 %v850
  %v926 = vpop.f32.mrf.mxu0
  %v927 = vadd.f32 0.0, %v926
  %v928 = vpop.f32.mrf.mxu0
  %v929 = vadd.f32 0.0, %v928
  %v930 = vpop.f32.mrf.mxu0
  %v931 = vpop.f32.mrf.mxu0
  %932 = vdwg.mxu0
  %v933 = vadd.f32 %v846, %v886
  %v934 = vadd.f32 %v847, %v888
  %v935 = vadd.f32 %v848, %v927
  %v936 = vadd.f32 %v849, %v929
  %v937 = vxor.u32 %v933, 2147483648
  %v938 = vmul.f32 %v937, 1.442695
  %v939 = vpow.pop %v938
  %v940 = vadd.f32 %v939, 1.0
  %v941 = vrcp.pop %v940
  %v942 = vmul.f32 1.0, %v941
  %v943 = vxor.u32 %v934, 2147483648
  %v944 = vmul.f32 %v943, 1.442695
  %v945 = vpow.pop %v944
  %v946 = vadd.f32 %v945, 1.0
  %v947 = vrcp.pop %v946
  %v948 = vmul.f32 1.0, %v947
  %v949 = vtanh.pop %v935
  %v950 = vxor.u32 %v936, 2147483648
  %v951 = vmul.f32 %v950, 1.442695
  %v952 = vpow.pop %v951
  %v953 = vadd.f32 %v952, 1.0
  %v954 = vrcp.pop %v953
  %v955 = vmul.f32 1.0, %v954
  %v956 = vmul.f32 %v948, %v840
  %v957 = vmul.f32 %v942, %v949
  %v958 = vadd.f32 %v956, %v957
  %v959 = vtanh.pop %v958
  %v960 = vmul.f32 %v955, %v959
  %s961 = smul.u32 4, 4
  %s962 = smul.addr %s961, 8
  %s963 = scalar_lea.vmem [#allocation2], %s962
  %v964 = vld [vmem:[%s963] sm:$0xff]
  %v965 = vld [vmem:[%s963 + $0x8] sm:$0xff]
  %v966 = vld [vmem:[%s963 + $0x10] sm:$0xff]
  %v967 = vld [vmem:[%s963 + $0x18] sm:$0xff]
  %v968 = vpack.c.bf16 %v960, %v960
  %969 = vmatprep.subr.bf16.mxu0 %v462
  %970 = vmatpush1.bf16.msra.mxu0 %v461
  %971 = vmatprep.subr.bf16.mxu0 %v458
  %972 = vmatpush1.bf16.msra.mxu0 %v457
  %973 = vmatprep.subr.bf16.mxu0 %v454
  %974 = vmatpush1.bf16.msra.mxu0 %v453
  %975 = vmatprep.subr.bf16.mxu0 %v450
  %976 = vmatpush1.bf16.msra.mxu0 %v449
  %977 = vmatprep.subr.bf16.mxu0 %v446
  %978 = vmatpush1.bf16.msra.mxu0 %v445
  %979 = vmatprep.subr.bf16.mxu0 %v442
  %980 = vmatpush1.bf16.msra.mxu0 %v441
  %981 = vmatprep.subr.bf16.mxu0 %v438
  %982 = vmatpush1.bf16.msra.mxu0 %v437
  %983 = vmatprep.subr.bf16.mxu0 %v434
  %984 = vmatpush1.bf16.msra.mxu0 %v433
  %985 = vmatprep.subr.bf16.mxu0 0
  %986 = vmatpush2.bf16.msra.mxu0 0
  %987 = vmatprep.subr.bf16.mxu0 0
  %988 = vmatpush2.bf16.msra.mxu0 0
  %989 = vmatprep.subr.bf16.mxu0 0
  %990 = vmatpush2.bf16.msra.mxu0 0
  %991 = vmatprep.subr.bf16.mxu0 0
  %992 = vmatpush2.bf16.msra.mxu0 0
  %993 = vmatprep.subr.bf16.mxu0 0
  %994 = vmatpush2.bf16.msra.mxu0 0
  %995 = vmatprep.subr.bf16.mxu0 0
  %996 = vmatpush2.bf16.msra.mxu0 0
  %997 = vmatprep.subr.bf16.mxu0 0
  %998 = vmatpush2.bf16.msra.mxu0 0
  %999 = vmatprep.subr.bf16.mxu0 0
  %1000 = vmatpush2.bf16.msra.mxu0 0
  %1001 = vmatprep.mubr.bf16.mxu0 0
  %1002 = vmatmul.mubr.bf16.gmra.mxu0 %v968
  %v1003 = vpop.f32.mrf.mxu0
  %v1004 = vadd.f32 0.0, %v1003
  %v1005 = vpop.f32.mrf.mxu0
  %v1006 = vadd.f32 0.0, %v1005
  %v1007 = vpop.f32.mrf.mxu0
  %v1008 = vpop.f32.mrf.mxu0
  %1009 = vdwg.mxu0
  %1010 = vmatprep.subr.bf16.mxu0 %v464
  %1011 = vmatpush1.bf16.msra.mxu0 %v463
  %1012 = vmatprep.subr.bf16.mxu0 %v460
  %1013 = vmatpush1.bf16.msra.mxu0 %v459
  %1014 = vmatprep.subr.bf16.mxu0 %v456
  %1015 = vmatpush1.bf16.msra.mxu0 %v455
  %1016 = vmatprep.subr.bf16.mxu0 %v452
  %1017 = vmatpush1.bf16.msra.mxu0 %v451
  %1018 = vmatprep.subr.bf16.mxu0 %v448
  %1019 = vmatpush1.bf16.msra.mxu0 %v447
  %1020 = vmatprep.subr.bf16.mxu0 %v444
  %1021 = vmatpush1.bf16.msra.mxu0 %v443
  %1022 = vmatprep.subr.bf16.mxu0 %v440
  %1023 = vmatpush1.bf16.msra.mxu0 %v439
  %1024 = vmatprep.subr.bf16.mxu0 %v436
  %1025 = vmatpush1.bf16.msra.mxu0 %v435
  %1026 = vmatprep.subr.bf16.mxu0 0
  %1027 = vmatpush2.bf16.msra.mxu0 0
  %1028 = vmatprep.subr.bf16.mxu0 0
  %1029 = vmatpush2.bf16.msra.mxu0 0
  %1030 = vmatprep.subr.bf16.mxu0 0
  %1031 = vmatpush2.bf16.msra.mxu0 0
  %1032 = vmatprep.subr.bf16.mxu0 0
  %1033 = vmatpush2.bf16.msra.mxu0 0
  %1034 = vmatprep.subr.bf16.mxu0 0
  %1035 = vmatpush2.bf16.msra.mxu0 0
  %1036 = vmatprep.subr.bf16.mxu0 0
  %1037 = vmatpush2.bf16.msra.mxu0 0
  %1038 = vmatprep.subr.bf16.mxu0 0
  %1039 = vmatpush2.bf16.msra.mxu0 0
  %1040 = vmatprep.subr.bf16.mxu0 0
  %1041 = vmatpush2.bf16.msra.mxu0 0
  %1042 = vmatprep.mubr.bf16.mxu0 0
  %1043 = vmatmul.mubr.bf16.gmra.mxu0 %v968
  %v1044 = vpop.f32.mrf.mxu0
  %v1045 = vadd.f32 0.0, %v1044
  %v1046 = vpop.f32.mrf.mxu0
  %v1047 = vadd.f32 0.0, %v1046
  %v1048 = vpop.f32.mrf.mxu0
  %v1049 = vpop.f32.mrf.mxu0
  %1050 = vdwg.mxu0
  %v1051 = vadd.f32 %v964, %v1004
  %v1052 = vadd.f32 %v965, %v1006
  %v1053 = vadd.f32 %v966, %v1045
  %v1054 = vadd.f32 %v967, %v1047
  %v1055 = vxor.u32 %v1051, 2147483648
  %v1056 = vmul.f32 %v1055, 1.442695
  %v1057 = vpow.pop %v1056
  %v1058 = vadd.f32 %v1057, 1.0
  %v1059 = vrcp.pop %v1058
  %v1060 = vmul.f32 1.0, %v1059
  %v1061 = vxor.u32 %v1052, 2147483648
  %v1062 = vmul.f32 %v1061, 1.442695
  %v1063 = vpow.pop %v1062
  %v1064 = vadd.f32 %v1063, 1.0
  %v1065 = vrcp.pop %v1064
  %v1066 = vmul.f32 1.0, %v1065
  %v1067 = vtanh.pop %v1053
  %v1068 = vxor.u32 %v1054, 2147483648
  %v1069 = vmul.f32 %v1068, 1.442695
  %v1070 = vpow.pop %v1069
  %v1071 = vadd.f32 %v1070, 1.0
  %v1072 = vrcp.pop %v1071
  %v1073 = vmul.f32 1.0, %v1072
  %v1074 = vmul.f32 %v1066, %v958
  %v1075 = vmul.f32 %v1060, %v1067
  %v1076 = vadd.f32 %v1074, %v1075
  %v1077 = vtanh.pop %v1076
  %v1078 = vmul.f32 %v1073, %v1077
  %s1079 = smul.u32 5, 4
  %s1080 = smul.addr %s1079, 8
  %s1081 = scalar_lea.vmem [#allocation2], %s1080
  %v1082 = vld [vmem:[%s1081] sm:$0xff]
  %v1083 = vld [vmem:[%s1081 + $0x8] sm:$0xff]
  %v1084 = vld [vmem:[%s1081 + $0x10] sm:$0xff]
  %v1085 = vld [vmem:[%s1081 + $0x18] sm:$0xff]
  %v1086 = vpack.c.bf16 %v1078, %v1078
  %1087 = vmatprep.subr.bf16.mxu0 %v462
  %1088 = vmatpush1.bf16.msra.mxu0 %v461
  %1089 = vmatprep.subr.bf16.mxu0 %v458
  %1090 = vmatpush1.bf16.msra.mxu0 %v457
  %1091 = vmatprep.subr.bf16.mxu0 %v454
  %1092 = vmatpush1.bf16.msra.mxu0 %v453
  %1093 = vmatprep.subr.bf16.mxu0 %v450
  %1094 = vmatpush1.bf16.msra.mxu0 %v449
  %1095 = vmatprep.subr.bf16.mxu0 %v446
  %1096 = vmatpush1.bf16.msra.mxu0 %v445
  %1097 = vmatprep.subr.bf16.mxu0 %v442
  %1098 = vmatpush1.bf16.msra.mxu0 %v441
  %1099 = vmatprep.subr.bf16.mxu0 %v438
  %1100 = vmatpush1.bf16.msra.mxu0 %v437
  %1101 = vmatprep.subr.bf16.mxu0 %v434
  %1102 = vmatpush1.bf16.msra.mxu0 %v433
  %1103 = vmatprep.subr.bf16.mxu0 0
  %1104 = vmatpush2.bf16.msra.mxu0 0
  %1105 = vmatprep.subr.bf16.mxu0 0
  %1106 = vmatpush2.bf16.msra.mxu0 0
  %1107 = vmatprep.subr.bf16.mxu0 0
  %1108 = vmatpush2.bf16.msra.mxu0 0
  %1109 = vmatprep.subr.bf16.mxu0 0
  %1110 = vmatpush2.bf16.msra.mxu0 0
  %1111 = vmatprep.subr.bf16.mxu0 0
  %1112 = vmatpush2.bf16.msra.mxu0 0
  %1113 = vmatprep.subr.bf16.mxu0 0
  %1114 = vmatpush2.bf16.msra.mxu0 0
  %1115 = vmatprep.subr.bf16.mxu0 0
  %1116 = vmatpush2.bf16.msra.mxu0 0
  %1117 = vmatprep.subr.bf16.mxu0 0
  %1118 = vmatpush2.bf16.msra.mxu0 0
  %1119 = vmatprep.mubr.bf16.mxu0 0
  %1120 = vmatmul.mubr.bf16.gmra.mxu0 %v1086
  %v1121 = vpop.f32.mrf.mxu0
  %v1122 = vadd.f32 0.0, %v1121
  %v1123 = vpop.f32.mrf.mxu0
  %v1124 = vadd.f32 0.0, %v1123
  %v1125 = vpop.f32.mrf.mxu0
  %v1126 = vpop.f32.mrf.mxu0
  %1127 = vdwg.mxu0
  %1128 = vmatprep.subr.bf16.mxu0 %v464
  %1129 = vmatpush1.bf16.msra.mxu0 %v463
  %1130 = vmatprep.subr.bf16.mxu0 %v460
  %1131 = vmatpush1.bf16.msra.mxu0 %v459
  %1132 = vmatprep.subr.bf16.mxu0 %v456
  %1133 = vmatpush1.bf16.msra.mxu0 %v455
  %1134 = vmatprep.subr.bf16.mxu0 %v452
  %1135 = vmatpush1.bf16.msra.mxu0 %v451
  %1136 = vmatprep.subr.bf16.mxu0 %v448
  %1137 = vmatpush1.bf16.msra.mxu0 %v447
  %1138 = vmatprep.subr.bf16.mxu0 %v444
  %1139 = vmatpush1.bf16.msra.mxu0 %v443
  %1140 = vmatprep.subr.bf16.mxu0 %v440
  %1141 = vmatpush1.bf16.msra.mxu0 %v439
  %1142 = vmatprep.subr.bf16.mxu0 %v436
  %1143 = vmatpush1.bf16.msra.mxu0 %v435
  %1144 = vmatprep.subr.bf16.mxu0 0
  %1145 = vmatpush2.bf16.msra.mxu0 0
  %1146 = vmatprep.subr.bf16.mxu0 0
  %1147 = vmatpush2.bf16.msra.mxu0 0
  %1148 = vmatprep.subr.bf16.mxu0 0
  %1149 = vmatpush2.bf16.msra.mxu0 0
  %1150 = vmatprep.subr.bf16.mxu0 0
  %1151 = vmatpush2.bf16.msra.mxu0 0
  %1152 = vmatprep.subr.bf16.mxu0 0
  %1153 = vmatpush2.bf16.msra.mxu0 0
  %1154 = vmatprep.subr.bf16.mxu0 0
  %1155 = vmatpush2.bf16.msra.mxu0 0
  %1156 = vmatprep.subr.bf16.mxu0 0
  %1157 = vmatpush2.bf16.msra.mxu0 0
  %1158 = vmatprep.subr.bf16.mxu0 0
  %1159 = vmatpush2.bf16.msra.mxu0 0
  %1160 = vmatprep.mubr.bf16.mxu0 0
  %1161 = vmatmul.mubr.bf16.gmra.mxu0 %v1086
  %v1162 = vpop.f32.mrf.mxu0
  %v1163 = vadd.f32 0.0, %v1162
  %v1164 = vpop.f32.mrf.mxu0
  %v1165 = vadd.f32 0.0, %v1164
  %v1166 = vpop.f32.mrf.mxu0
  %v1167 = vpop.f32.mrf.mxu0
  %1168 = vdwg.mxu0
  %v1169 = vadd.f32 %v1082, %v1122
  %v1170 = vadd.f32 %v1083, %v1124
  %v1171 = vadd.f32 %v1084, %v1163
  %v1172 = vadd.f32 %v1085, %v1165
  %v1173 = vxor.u32 %v1169, 2147483648
  %v1174 = vmul.f32 %v1173, 1.442695
  %v1175 = vpow.pop %v1174
  %v1176 = vadd.f32 %v1175, 1.0
  %v1177 = vrcp.pop %v1176
  %v1178 = vmul.f32 1.0, %v1177
  %v1179 = vxor.u32 %v1170, 2147483648
  %v1180 = vmul.f32 %v1179, 1.442695
  %v1181 = vpow.pop %v1180
  %v1182 = vadd.f32 %v1181, 1.0
  %v1183 = vrcp.pop %v1182
  %v1184 = vmul.f32 1.0, %v1183
  %v1185 = vtanh.pop %v1171
  %v1186 = vxor.u32 %v1172, 2147483648
  %v1187 = vmul.f32 %v1186, 1.442695
  %v1188 = vpow.pop %v1187
  %v1189 = vadd.f32 %v1188, 1.0
  %v1190 = vrcp.pop %v1189
  %v1191 = vmul.f32 1.0, %v1190
  %v1192 = vmul.f32 %v1184, %v1076
  %v1193 = vmul.f32 %v1178, %v1185
  %v1194 = vadd.f32 %v1192, %v1193
  %v1195 = vtanh.pop %v1194
  %v1196 = vmul.f32 %v1191, %v1195
  %s1197 = smul.u32 6, 4
  %s1198 = smul.addr %s1197, 8
  %s1199 = scalar_lea.vmem [#allocation2], %s1198
  %v1200 = vld [vmem:[%s1199] sm:$0xff]
  %v1201 = vld [vmem:[%s1199 + $0x8] sm:$0xff]
  %v1202 = vld [vmem:[%s1199 + $0x10] sm:$0xff]
  %v1203 = vld [vmem:[%s1199 + $0x18] sm:$0xff]
  %v1204 = vpack.c.bf16 %v1196, %v1196
  %1205 = vmatprep.subr.bf16.mxu0 %v462
  %1206 = vmatpush1.bf16.msra.mxu0 %v461
  %1207 = vmatprep.subr.bf16.mxu0 %v458
  %1208 = vmatpush1.bf16.msra.mxu0 %v457
  %1209 = vmatprep.subr.bf16.mxu0 %v454
  %1210 = vmatpush1.bf16.msra.mxu0 %v453
  %1211 = vmatprep.subr.bf16.mxu0 %v450
  %1212 = vmatpush1.bf16.msra.mxu0 %v449
  %1213 = vmatprep.subr.bf16.mxu0 %v446
  %1214 = vmatpush1.bf16.msra.mxu0 %v445
  %1215 = vmatprep.subr.bf16.mxu0 %v442
  %1216 = vmatpush1.bf16.msra.mxu0 %v441
  %1217 = vmatprep.subr.bf16.mxu0 %v438
  %1218 = vmatpush1.bf16.msra.mxu0 %v437
  %1219 = vmatprep.subr.bf16.mxu0 %v434
  %1220 = vmatpush1.bf16.msra.mxu0 %v433
  %1221 = vmatprep.subr.bf16.mxu0 0
  %1222 = vmatpush2.bf16.msra.mxu0 0
  %1223 = vmatprep.subr.bf16.mxu0 0
  %1224 = vmatpush2.bf16.msra.mxu0 0
  %1225 = vmatprep.subr.bf16.mxu0 0
  %1226 = vmatpush2.bf16.msra.mxu0 0
  %1227 = vmatprep.subr.bf16.mxu0 0
  %1228 = vmatpush2.bf16.msra.mxu0 0
  %1229 = vmatprep.subr.bf16.mxu0 0
  %1230 = vmatpush2.bf16.msra.mxu0 0
  %1231 = vmatprep.subr.bf16.mxu0 0
  %1232 = vmatpush2.bf16.msra.mxu0 0
  %1233 = vmatprep.subr.bf16.mxu0 0
  %1234 = vmatpush2.bf16.msra.mxu0 0
  %1235 = vmatprep.subr.bf16.mxu0 0
  %1236 = vmatpush2.bf16.msra.mxu0 0
  %1237 = vmatprep.mubr.bf16.mxu0 0
  %1238 = vmatmul.mubr.bf16.gmra.mxu0 %v1204
  %v1239 = vpop.f32.mrf.mxu0
  %v1240 = vadd.f32 0.0, %v1239
  %v1241 = vpop.f32.mrf.mxu0
  %v1242 = vadd.f32 0.0, %v1241
  %v1243 = vpop.f32.mrf.mxu0
  %v1244 = vpop.f32.mrf.mxu0
  %1245 = vdwg.mxu0
  %1246 = vmatprep.subr.bf16.mxu0 %v464
  %1247 = vmatpush1.bf16.msra.mxu0 %v463
  %1248 = vmatprep.subr.bf16.mxu0 %v460
  %1249 = vmatpush1.bf16.msra.mxu0 %v459
  %1250 = vmatprep.subr.bf16.mxu0 %v456
  %1251 = vmatpush1.bf16.msra.mxu0 %v455
  %1252 = vmatprep.subr.bf16.mxu0 %v452
  %1253 = vmatpush1.bf16.msra.mxu0 %v451
  %1254 = vmatprep.subr.bf16.mxu0 %v448
  %1255 = vmatpush1.bf16.msra.mxu0 %v447
  %1256 = vmatprep.subr.bf16.mxu0 %v444
  %1257 = vmatpush1.bf16.msra.mxu0 %v443
  %1258 = vmatprep.subr.bf16.mxu0 %v440
  %1259 = vmatpush1.bf16.msra.mxu0 %v439
  %1260 = vmatprep.subr.bf16.mxu0 %v436
  %1261 = vmatpush1.bf16.msra.mxu0 %v435
  %1262 = vmatprep.subr.bf16.mxu0 0
  %1263 = vmatpush2.bf16.msra.mxu0 0
  %1264 = vmatprep.subr.bf16.mxu0 0
  %1265 = vmatpush2.bf16.msra.mxu0 0
  %1266 = vmatprep.subr.bf16.mxu0 0
  %1267 = vmatpush2.bf16.msra.mxu0 0
  %1268 = vmatprep.subr.bf16.mxu0 0
  %1269 = vmatpush2.bf16.msra.mxu0 0
  %1270 = vmatprep.subr.bf16.mxu0 0
  %1271 = vmatpush2.bf16.msra.mxu0 0
  %1272 = vmatprep.subr.bf16.mxu0 0
  %1273 = vmatpush2.bf16.msra.mxu0 0
  %1274 = vmatprep.subr.bf16.mxu0 0
  %1275 = vmatpush2.bf16.msra.mxu0 0
  %1276 = vmatprep.subr.bf16.mxu0 0
  %1277 = vmatpush2.bf16.msra.mxu0 0
  %1278 = vmatprep.mubr.bf16.mxu0 0
  %1279 = vmatmul.mubr.bf16.gmra.mxu0 %v1204
  %v1280 = vpop.f32.mrf.mxu0
  %v1281 = vadd.f32 0.0, %v1280
  %v1282 = vpop.f32.mrf.mxu0
  %v1283 = vadd.f32 0.0, %v1282
  %v1284 = vpop.f32.mrf.mxu0
  %v1285 = vpop.f32.mrf.mxu0
  %1286 = vdwg.mxu0
  %v1287 = vadd.f32 %v1200, %v1240
  %v1288 = vadd.f32 %v1201, %v1242
  %v1289 = vadd.f32 %v1202, %v1281
  %v1290 = vadd.f32 %v1203, %v1283
  %v1291 = vxor.u32 %v1287, 2147483648
  %v1292 = vmul.f32 %v1291, 1.442695
  %v1293 = vpow.pop %v1292
  %v1294 = vadd.f32 %v1293, 1.0
  %v1295 = vrcp.pop %v1294
  %v1296 = vmul.f32 1.0, %v1295
  %v1297 = vxor.u32 %v1288, 2147483648
  %v1298 = vmul.f32 %v1297, 1.442695
  %v1299 = vpow.pop %v1298
  %v1300 = vadd.f32 %v1299, 1.0
  %v1301 = vrcp.pop %v1300
  %v1302 = vmul.f32 1.0, %v1301
  %v1303 = vtanh.pop %v1289
  %v1304 = vxor.u32 %v1290, 2147483648
  %v1305 = vmul.f32 %v1304, 1.442695
  %v1306 = vpow.pop %v1305
  %v1307 = vadd.f32 %v1306, 1.0
  %v1308 = vrcp.pop %v1307
  %v1309 = vmul.f32 1.0, %v1308
  %v1310 = vmul.f32 %v1302, %v1194
  %v1311 = vmul.f32 %v1296, %v1303
  %v1312 = vadd.f32 %v1310, %v1311
  %v1313 = vtanh.pop %v1312
  %v1314 = vmul.f32 %v1309, %v1313
  %s1315 = smul.u32 7, 4
  %s1316 = smul.addr %s1315, 8
  %s1317 = scalar_lea.vmem [#allocation2], %s1316
  %v1318 = vld [vmem:[%s1317] sm:$0xff]
  %v1319 = vld [vmem:[%s1317 + $0x8] sm:$0xff]
  %v1320 = vld [vmem:[%s1317 + $0x10] sm:$0xff]
  %v1321 = vld [vmem:[%s1317 + $0x18] sm:$0xff]
  %v1322 = vpack.c.bf16 %v1314, %v1314
  %1323 = vmatprep.subr.bf16.mxu0 %v462
  %1324 = vmatpush1.bf16.msra.mxu0 %v461
  %1325 = vmatprep.subr.bf16.mxu0 %v458
  %1326 = vmatpush1.bf16.msra.mxu0 %v457
  %1327 = vmatprep.subr.bf16.mxu0 %v454
  %1328 = vmatpush1.bf16.msra.mxu0 %v453
  %1329 = vmatprep.subr.bf16.mxu0 %v450
  %1330 = vmatpush1.bf16.msra.mxu0 %v449
  %1331 = vmatprep.subr.bf16.mxu0 %v446
  %1332 = vmatpush1.bf16.msra.mxu0 %v445
  %1333 = vmatprep.subr.bf16.mxu0 %v442
  %1334 = vmatpush1.bf16.msra.mxu0 %v441
  %1335 = vmatprep.subr.bf16.mxu0 %v438
  %1336 = vmatpush1.bf16.msra.mxu0 %v437
  %1337 = vmatprep.subr.bf16.mxu0 %v434
  %1338 = vmatpush1.bf16.msra.mxu0 %v433
  %1339 = vmatprep.subr.bf16.mxu0 0
  %1340 = vmatpush2.bf16.msra.mxu0 0
  %1341 = vmatprep.subr.bf16.mxu0 0
  %1342 = vmatpush2.bf16.msra.mxu0 0
  %1343 = vmatprep.subr.bf16.mxu0 0
  %1344 = vmatpush2.bf16.msra.mxu0 0
  %1345 = vmatprep.subr.bf16.mxu0 0
  %1346 = vmatpush2.bf16.msra.mxu0 0
  %1347 = vmatprep.subr.bf16.mxu0 0
  %1348 = vmatpush2.bf16.msra.mxu0 0
  %1349 = vmatprep.subr.bf16.mxu0 0
  %1350 = vmatpush2.bf16.msra.mxu0 0
  %1351 = vmatprep.subr.bf16.mxu0 0
  %1352 = vmatpush2.bf16.msra.mxu0 0
  %1353 = vmatprep.subr.bf16.mxu0 0
  %1354 = vmatpush2.bf16.msra.mxu0 0
  %1355 = vmatprep.mubr.bf16.mxu0 0
  %1356 = vmatmul.mubr.bf16.gmra.mxu0 %v1322
  %v1357 = vpop.f32.mrf.mxu0
  %v1358 = vadd.f32 0.0, %v1357
  %v1359 = vpop.f32.mrf.mxu0
  %v1360 = vadd.f32 0.0, %v1359
  %v1361 = vpop.f32.mrf.mxu0
  %v1362 = vpop.f32.mrf.mxu0
  %1363 = vdwg.mxu0
  %1364 = vmatprep.subr.bf16.mxu0 %v464
  %1365 = vmatpush1.bf16.msra.mxu0 %v463
  %1366 = vmatprep.subr.bf16.mxu0 %v460
  %1367 = vmatpush1.bf16.msra.mxu0 %v459
  %1368 = vmatprep.subr.bf16.mxu0 %v456
  %1369 = vmatpush1.bf16.msra.mxu0 %v455
  %1370 = vmatprep.subr.bf16.mxu0 %v452
  %1371 = vmatpush1.bf16.msra.mxu0 %v451
  %1372 = vmatprep.subr.bf16.mxu0 %v448
  %1373 = vmatpush1.bf16.msra.mxu0 %v447
  %1374 = vmatprep.subr.bf16.mxu0 %v444
  %1375 = vmatpush1.bf16.msra.mxu0 %v443
  %1376 = vmatprep.subr.bf16.mxu0 %v440
  %1377 = vmatpush1.bf16.msra.mxu0 %v439
  %1378 = vmatprep.subr.bf16.mxu0 %v436
  %1379 = vmatpush1.bf16.msra.mxu0 %v435
  %1380 = vmatprep.subr.bf16.mxu0 0
  %1381 = vmatpush2.bf16.msra.mxu0 0
  %1382 = vmatprep.subr.bf16.mxu0 0
  %1383 = vmatpush2.bf16.msra.mxu0 0
  %1384 = vmatprep.subr.bf16.mxu0 0
  %1385 = vmatpush2.bf16.msra.mxu0 0
  %1386 = vmatprep.subr.bf16.mxu0 0
  %1387 = vmatpush2.bf16.msra.mxu0 0
  %1388 = vmatprep.subr.bf16.mxu0 0
  %1389 = vmatpush2.bf16.msra.mxu0 0
  %1390 = vmatprep.subr.bf16.mxu0 0
  %1391 = vmatpush2.bf16.msra.mxu0 0
  %1392 = vmatprep.subr.bf16.mxu0 0
  %1393 = vmatpush2.bf16.msra.mxu0 0
  %1394 = vmatprep.subr.bf16.mxu0 0
  %1395 = vmatpush2.bf16.msra.mxu0 0
  %1396 = vmatprep.mubr.bf16.mxu0 0
  %1397 = vmatmul.mubr.bf16.gmra.mxu0 %v1322
  %v1398 = vpop.f32.mrf.mxu0
  %v1399 = vadd.f32 0.0, %v1398
  %v1400 = vpop.f32.mrf.mxu0
  %v1401 = vadd.f32 0.0, %v1400
  %v1402 = vpop.f32.mrf.mxu0
  %v1403 = vpop.f32.mrf.mxu0
  %1404 = vdwg.mxu0
  %v1405 = vadd.f32 %v1318, %v1358
  %v1406 = vadd.f32 %v1319, %v1360
  %v1407 = vadd.f32 %v1320, %v1399
  %v1408 = vadd.f32 %v1321, %v1401
  %v1409 = vxor.u32 %v1405, 2147483648
  %v1410 = vmul.f32 %v1409, 1.442695
  %v1411 = vpow.pop %v1410
  %v1412 = vadd.f32 %v1411, 1.0
  %v1413 = vrcp.pop %v1412
  %v1414 = vmul.f32 1.0, %v1413
  %v1415 = vxor.u32 %v1406, 2147483648
  %v1416 = vmul.f32 %v1415, 1.442695
  %v1417 = vpow.pop %v1416
  %v1418 = vadd.f32 %v1417, 1.0
  %v1419 = vrcp.pop %v1418
  %v1420 = vmul.f32 1.0, %v1419
  %v1421 = vtanh.pop %v1407
  %v1422 = vxor.u32 %v1408, 2147483648
  %v1423 = vmul.f32 %v1422, 1.442695
  %v1424 = vpow.pop %v1423
  %v1425 = vadd.f32 %v1424, 1.0
  %v1426 = vrcp.pop %v1425
  %v1427 = vmul.f32 1.0, %v1426
  %v1428 = vmul.f32 %v1420, %v1312
  %v1429 = vmul.f32 %v1414, %v1421
  %v1430 = vadd.f32 %v1428, %v1429
  %v1431 = vtanh.pop %v1430
  %v1432 = vmul.f32 %v1427, %v1431
  %1433 = vst [vmem:[#allocation3] sm:$0xff] %v1432
  %1434 = vst [vmem:[#allocation4] sm:$0xff] %v1430
  // Predicated region
  $region30: #{rnn_feature_forward.1} parent=0 // pred_check
    %p1435 = pneg %p24
  $region31: #{rnn_feature_forward.1} parent=0 // pred_check_branch
    %1437 = sbr.rel (%p1435) target = $region33
  $region32: #{rnn_feature_forward.1} parent=0 // pred_region
    %v1438 = vpack.c.bf16 %v1432, %v1432
    %v1439 = vld [vmem:[%s4] sm:$0xf]
    %v1440 = vld [vmem:[%s4 + $0x4] sm:$0xf]
    %v1441 = vld [vmem:[%s4 + $0x8] sm:$0xf]
    %v1442 = vld [vmem:[%s4 + $0xc] sm:$0xf]
    %v1443 = vld [vmem:[%s4 + $0x10] sm:$0xf]
    %v1444 = vld [vmem:[%s4 + $0x14] sm:$0xf]
    %v1445 = vld [vmem:[%s4 + $0x18] sm:$0xf]
    %v1446 = vld [vmem:[%s4 + $0x1c] sm:$0xf]
    %v1447 = vld [vmem:[%s4 + $0x20] sm:$0xf]
    %v1448 = vld [vmem:[%s4 + $0x24] sm:$0xf]
    %v1449 = vld [vmem:[%s4 + $0x28] sm:$0xf]
    %v1450 = vld [vmem:[%s4 + $0x2c] sm:$0xf]
    %v1451 = vld [vmem:[%s4 + $0x30] sm:$0xf]
    %v1452 = vld [vmem:[%s4 + $0x34] sm:$0xf]
    %v1453 = vld [vmem:[%s4 + $0x38] sm:$0xf]
    %v1454 = vld [vmem:[%s4 + $0x3c] sm:$0xf]
    %v1455 = vld [vmem:[%s5] sm:$0x1]
    %v1457 = vlaneseq
    %v1458 = vshrl.u32 %v1457, 7
    %v1459 = vsub.s32 0, %v1458
    %v1460 = vrot.slane %v1455, %v1459
    %v1478 = vunpack.c.l.b16 %v1439
    %v1479 = vunpack.c.l.b16 %v1440
    %v1480 = vunpack.c.l.b16 %v1441
    %v1481 = vunpack.c.l.b16 %v1442
    %v1482 = vunpack.c.l.b16 %v1443
    %v1483 = vunpack.c.l.b16 %v1444
    %v1484 = vunpack.c.l.b16 %v1445
    %v1485 = vunpack.c.l.b16 %v1446
    %v1486 = vunpack.c.l.b16 %v1447
    %v1487 = vunpack.c.l.b16 %v1448
    %v1488 = vunpack.c.l.b16 %v1449
    %v1489 = vunpack.c.l.b16 %v1450
    %v1490 = vunpack.c.l.b16 %v1451
    %v1491 = vunpack.c.l.b16 %v1452
    %v1492 = vunpack.c.l.b16 %v1453
    %v1493 = vunpack.c.l.b16 %v1454
    %v1494 = vpack.c.b16 %v1479, %v1478
    %v1495 = vpack.c.b16 %v1481, %v1480
    %v1496 = vpack.c.b16 %v1483, %v1482
    %v1497 = vpack.c.b16 %v1485, %v1484
    %v1498 = vpack.c.b16 %v1487, %v1486
    %v1499 = vpack.c.b16 %v1489, %v1488
    %v1500 = vpack.c.b16 %v1491, %v1490
    %v1501 = vpack.c.b16 %v1493, %v1492
    %1510 = vmatprep.subr.bf16.mxu0 0
    %1511 = vmatpush1.bf16.msra.mxu0 %v1501
    %1512 = vmatprep.subr.bf16.mxu0 0
    %1513 = vmatpush1.bf16.msra.mxu0 %v1500
    %1514 = vmatprep.subr.bf16.mxu0 0
    %1515 = vmatpush1.bf16.msra.mxu0 %v1499
    %1516 = vmatprep.subr.bf16.mxu0 0
    %1517 = vmatpush1.bf16.msra.mxu0 %v1498
    %1518 = vmatprep.subr.bf16.mxu0 0
    %1519 = vmatpush1.bf16.msra.mxu0 %v1497
    %1520 = vmatprep.subr.bf16.mxu0 0
    %1521 = vmatpush1.bf16.msra.mxu0 %v1496
    %1522 = vmatprep.subr.bf16.mxu0 0
    %1523 = vmatpush1.bf16.msra.mxu0 %v1495
    %1524 = vmatprep.subr.bf16.mxu0 0
    %1525 = vmatpush1.bf16.msra.mxu0 %v1494
    %1526 = vmatprep.subr.bf16.mxu0 0
    %1527 = vmatpush2.bf16.msra.mxu0 0
    %1528 = vmatprep.subr.bf16.mxu0 0
    %1529 = vmatpush2.bf16.msra.mxu0 0
    %1530 = vmatprep.subr.bf16.mxu0 0
    %1531 = vmatpush2.bf16.msra.mxu0 0
    %1532 = vmatprep.subr.bf16.mxu0 0
    %1533 = vmatpush2.bf16.msra.mxu0 0
    %1534 = vmatprep.subr.bf16.mxu0 0
    %1535 = vmatpush2.bf16.msra.mxu0 0
    %1536 = vmatprep.subr.bf16.mxu0 0
    %1537 = vmatpush2.bf16.msra.mxu0 0
    %1538 = vmatprep.subr.bf16.mxu0 0
    %1539 = vmatpush2.bf16.msra.mxu0 0
    %1540 = vmatprep.subr.bf16.mxu0 0
    %1541 = vmatpush2.bf16.msra.mxu0 0
    %1542 = vmatprep.mubr.bf16.mxu0 0
    %1543 = vmatmul.mubr.bf16.gmra.mxu0 %v1438
    %v1544 = vpop.f32.mrf.mxu0
    %v1545 = vadd.f32 %v1460, %v1544
    %v1546 = vpop.f32.mrf.mxu0
    %v1547 = vpop.f32.mrf.mxu0
    %v1548 = vpop.f32.mrf.mxu0
    %1549 = vdwg.mxu0
    %1550 = vst [vmem:[%s6] sm:$0xff] %v1545
  $region33: #{rnn_feature_forward.1} parent=0 // pred_fallthru
    _
  // Predicated region
  $region34: #{rnn_feature_forward.1} parent=0 // pred_check
    _
  $region35: #{rnn_feature_forward.1} parent=0 // pred_check_branch
    %1552 = sbr.rel (0) target = $region37
  $region36: #{rnn_feature_forward.1} parent=0 // pred_region
    _
  $region37: #{rnn_feature_forward.1} parent=0 // pred_fallthru
    _
  // Predicated region
  $region38: #{rnn_feature_forward.1} parent=0 // pred_check
    _
  $region39: #{rnn_feature_forward.1} parent=0 // pred_check_branch
    %1554 = sbr.rel (0) target = $region41
  $region40: #{rnn_feature_forward.1} parent=0 // pred_region
    _
  $region41: #{rnn_feature_forward.1} parent=0 // pred_fallthru
    _

</llo_original>
